<compile_context>
chip_gen: v6e
topology: v6e:2x2x1
jax: 0.10.0
libtpu: 0.0.40
codegen_flags: <defaults>
</compile_context>

<pallas_src>
import functools

import jax
import jax.numpy as jnp
from jax import lax
from jax.experimental import pallas as pl
from jax.experimental.pallas import tpu as pltpu


def _expressive_inverse_kernel(t_ref, s_ref, a_ref, ws_ref, wa_ref, vec_ref,
                               out_ref, *, eps, slope):
    t = t_ref[0, 0]                                          # SMEM scalar (f32)
    state = s_ref[...]                                       # (TB, S) bf16
    action = a_ref[...]                                      # (TB, A) f32
    vecs = vec_ref[...]                                      # (4, A) f32: [bs; gamma; beta; ba]

    # --- state path: Linear(S->A) -> LayerNorm(A) -> ReLU (f32 accumulation) ----
    h = jnp.dot(state, ws_ref[...], preferred_element_type=jnp.float32)
    h = h + vecs[0:1, :]
    mu = jnp.mean(h, axis=-1, keepdims=True)
    var = jnp.mean((h - mu) * (h - mu), axis=-1, keepdims=True)   # biased, as nn.LayerNorm
    scale = vecs[1:2, :] * lax.rsqrt(var + eps)              # gamma * rsqrt (EUP slot)
    ts = jnp.maximum((h - mu) * scale + vecs[2:3, :], 0.0)

    # --- action path: LinearInvertibleModule -> LeakyReLU ------------------------
    z = jnp.dot(action.astype(jnp.bfloat16), wa_ref[...],
                preferred_element_type=jnp.float32) + vecs[3:4, :]
    lr = jnp.where(z > 0, z, slope * z)

    # --- single explicit-Euler step over [0, t]; residual stays exact f32 --------
    out_ref[...] = (action + t * (lr + ts)).astype(out_ref.dtype)


def prepare_params(params):
    """One-time parameter packing (call at load time, NOT per forward call)."""
    ws, bs, gamma, beta, wa, ba = params
    A = wa.shape[0]
    ws_bf = jnp.asarray(ws, jnp.bfloat16)                    # (S, A), VMEM-resident
    wa_bf = jnp.asarray(wa, jnp.bfloat16)                    # (A, A), VMEM-resident
    vecs = jnp.stack([                                       # (4, A): one resident DMA
        jnp.asarray(bs, jnp.float32).reshape(A),
        jnp.asarray(gamma, jnp.float32).reshape(A),
        jnp.asarray(beta, jnp.float32).reshape(A),
        jnp.asarray(ba, jnp.float32).reshape(A),
    ], axis=0)
    return ws_bf, wa_bf, vecs


def expressive_inverse_block(state, action, prepared_params, *, t, eps=1e-5,
                             slope=0.01, block_b=None):
    """state: (B, S) [ideally bf16 from upstream], action: (B, A) f32 -> (B, A) f32."""
    ws_bf, wa_bf, vecs = prepared_params
    B, S = state.shape
    _, A = action.shape

    # Stream the matmul-only operand in bf16 (no-op if the caller already did it);
    # the residual path (action) stays exact f32.
    state = state.astype(jnp.bfloat16)
    action = action.astype(jnp.float32)
    t_arr = jnp.full((1, 1), t, jnp.float32)                 # SMEM scalar, no recompiles

    # ---- batch tiling --------------------------------------------------------
    if block_b is None:
        block_b = 2048
    tb = min(block_b, B)
    if tb < B:
        tb = max(8, (tb // 8) * 8)
    # Keep >= 2 grid steps (when B allows) so both v7x TensorCores get work; the
    # extra step costs ~0.35us on single-TC v5e/v6e, negligible vs the DMA.
    if B > 8 and pl.cdiv(B, tb) < 2:
        tb = min(B, ((((B + 1) // 2) + 7) // 8) * 8)

    kernel = functools.partial(_expressive_inverse_kernel,
                               eps=float(eps), slope=float(slope))

    cost = pl.CostEstimate(
        flops=2 * B * A * (S + A) + 12 * B * A,
        transcendentals=B,                                   # one rsqrt per row
        bytes_accessed=B * S * 2 + 2 * B * A * 4 + (S * A + A * A) * 2 + 4 * A * 4 + 4,
    )

    return pl.pallas_call(
        kernel,
        out_shape=jax.ShapeDtypeStruct((B, A), jnp.float32),
        grid_spec=pl.GridSpec(
            grid=(pl.cdiv(B, tb),),
            in_specs=[
                pl.BlockSpec(memory_space=pltpu.MemorySpace.SMEM),  # t scalar
                pl.BlockSpec((tb, S), lambda i: (i, 0)),            # state (bf16 stream)
                pl.BlockSpec((tb, A), lambda i: (i, 0)),            # action (f32 stream)
                pl.BlockSpec((S, A), lambda i: (0, 0)),             # ws bf16 (resident)
                pl.BlockSpec((A, A), lambda i: (0, 0)),             # wa bf16 (resident)
                pl.BlockSpec((4, A), lambda i: (0, 0)),             # packed vectors (resident)
            ],
            out_specs=pl.BlockSpec((tb, A), lambda i: (i, 0)),
        ),
        compiler_params=pltpu.CompilerParams(
            dimension_semantics=("parallel",)),
        cost_estimate=cost,
    )(t_arr, state, action, ws_bf, wa_bf, vecs)


def _reference(state, action, params, *, t, eps=1e-5, slope=0.01):
    ws, bs, gamma, beta, wa, ba = params
    h = state @ ws + bs
    mu = h.mean(-1, keepdims=True)
    var = ((h - mu) ** 2).mean(-1, keepdims=True)
    ts = jnp.maximum((h - mu) / jnp.sqrt(var + eps) * gamma + beta, 0.0)
    z = action @ wa + ba
    lr = jnp.where(z > 0, z, slope * z)
    return action + t * (lr + ts)


if __name__ == "__main__":
    B, state_dim, action_dim = 512, 32, 16
    t_end = 0.5

    key = jax.random.PRNGKey(0)
    ks = jax.random.split(key, 6)

    state_f32 = jax.random.normal(ks[0], (B, state_dim), jnp.float32)
    action = jax.random.normal(ks[1], (B, action_dim), jnp.float32)

    # Parameters mirror the PyTorch module; weights are stored pre-transposed as
    # (in_features, out_features) so the kernel computes x @ W.
    ws = jax.random.normal(ks[2], (state_dim, action_dim), jnp.float32) * 0.1   # Linear(S->A).W^T
    bs = jax.random.normal(ks[3], (action_dim,), jnp.float32) * 0.1             # Linear(S->A).b
    gamma = jnp.ones((action_dim,), jnp.float32)                                # LayerNorm weight
    beta = jnp.zeros((action_dim,), jnp.float32)                                # LayerNorm bias
    wa = jax.random.normal(ks[4], (action_dim, action_dim), jnp.float32) * 0.1  # LinearInvertibleModule.W^T
    ba = jax.random.normal(ks[5], (action_dim,), jnp.float32) * 0.1             # LinearInvertibleModule.b
    params = (ws, bs, gamma, beta, wa, ba)

    prepared = prepare_params(params)          # one-time packing, hoisted off the call path

    # Upstream would ideally already hand us bf16 state; emulate that here so the
    # kernel streams bf16 and the reference sees the identical rounded values.
    state_bf16 = state_f32.astype(jnp.bfloat16)

    out = expressive_inverse_block(state_bf16, action, prepared, t=t_end)
    jax.block_until_ready(out)

    ref = _reference(state_bf16.astype(jnp.float32), action, params, t=t_end)
    assert out.shape == (B, action_dim)
    # Matmul operands are bf16 (f32 accumulation); epilogue and residual are f32.
    assert jnp.allclose(out, ref, atol=2e-2, rtol=2e-2), "mismatch vs reference"

    print("KERNEL_OK")
</pallas_src>

<mosaic_0001>
module attributes {stable_mosaic.version = 11 : i64} {
  func.func @_expressive_inverse_kernel(%arg0: i32, %arg1: memref<1x1xf32, #tpu.memory_space<smem>>, %arg2: memref<256x32xbf16, #tpu.memory_space<vmem>>, %arg3: memref<256x16xf32, #tpu.memory_space<vmem>>, %arg4: memref<32x16xbf16, #tpu.memory_space<vmem>>, %arg5: memref<16x16xbf16, #tpu.memory_space<vmem>>, %arg6: memref<4x16xf32, #tpu.memory_space<vmem>>, %arg7: memref<256x16xf32, #tpu.memory_space<vmem>>) attributes {dimension_semantics = [#tpu.dimension_semantics<parallel>], iteration_bounds = array<i64: 2>, scalar_prefetch = 0 : i64, scratch_operands = 0 : i64, tpu.core_type = #tpu.core_type<tc>, window_params = [{transform_indices = @transform_0, window_bounds = array<i64: 1, 1>}, {transform_indices = @transform_1, window_bounds = array<i64: 256, 32>}, {transform_indices = @transform_2, window_bounds = array<i64: 256, 16>}, {pipeline_mode = #tpu.pipeline_mode<synchronous>, transform_indices = @transform_3, window_bounds = array<i64: 32, 16>}, {pipeline_mode = #tpu.pipeline_mode<synchronous>, transform_indices = @transform_4, window_bounds = array<i64: 16, 16>}, {pipeline_mode = #tpu.pipeline_mode<synchronous>, transform_indices = @transform_5, window_bounds = array<i64: 4, 16>}, {transform_indices = @transform_6, window_bounds = array<i64: 256, 16>}]} {
    %c0 = arith.constant 0 : index
    %c0_0 = arith.constant 0 : index
    %0 = memref.load %arg1[%c0, %c0_0] : memref<1x1xf32, #tpu.memory_space<smem>>
    %c0_1 = arith.constant 0 : index
    %c0_2 = arith.constant 0 : index
    %1 = vector.load %arg2[%c0_1, %c0_2] : memref<256x32xbf16, #tpu.memory_space<vmem>>, vector<256x32xbf16>
    %c0_3 = arith.constant 0 : index
    %c0_4 = arith.constant 0 : index
    %2 = vector.load %arg3[%c0_3, %c0_4] : memref<256x16xf32, #tpu.memory_space<vmem>>, vector<256x16xf32>
    %c0_5 = arith.constant 0 : index
    %c0_6 = arith.constant 0 : index
    %3 = vector.load %arg6[%c0_5, %c0_6] : memref<4x16xf32, #tpu.memory_space<vmem>>, vector<4x16xf32>
    %c0_7 = arith.constant 0 : index
    %c0_8 = arith.constant 0 : index
    %4 = vector.load %arg4[%c0_7, %c0_8] : memref<32x16xbf16, #tpu.memory_space<vmem>>, vector<32x16xbf16>
    %cst = arith.constant dense<0.000000e+00> : vector<256x16xf32>
    %5 = tpu.matmul %1, %4, %cst {dimension_numbers = #tpu.dot_dimension_numbers<[1], [0], [0], [1], [0, 0, 1, 1], [], []>} : vector<256x32xbf16>, vector<32x16xbf16>, vector<256x16xf32> -> vector<256x16xf32>
    %6 = vector.extract_strided_slice %3 {offsets = [0, 0], sizes = [1, 16], strides = [1, 1]} : vector<4x16xf32> to vector<1x16xf32>
    %7 = vector.broadcast %6 : vector<1x16xf32> to vector<256x16xf32>
    %8 = arith.addf %5, %7 : vector<256x16xf32>
    %cst_9 = arith.constant dense<0.000000e+00> : vector<256xf32>
    %9 = vector.multi_reduction <add>, %8, %cst_9 [1] : vector<256x16xf32> to vector<256xf32>
    %10 = vector.shape_cast %9 : vector<256xf32> to vector<256x1xf32>
    %cst_10 = arith.constant 1.600000e+01 : f32
    %11 = vector.broadcast %cst_10 : f32 to vector<256x1xf32>
    %12 = arith.divf %10, %11 : vector<256x1xf32>
    %13 = vector.broadcast %12 : vector<256x1xf32> to vector<256x16xf32>
    %14 = arith.subf %8, %13 : vector<256x16xf32>
    %15 = vector.broadcast %12 : vector<256x1xf32> to vector<256x16xf32>
    %16 = arith.subf %8, %15 : vector<256x16xf32>
    %17 = arith.mulf %14, %16 : vector<256x16xf32>
    %cst_11 = arith.constant dense<0.000000e+00> : vector<256xf32>
    %18 = vector.multi_reduction <add>, %17, %cst_11 [1] : vector<256x16xf32> to vector<256xf32>
    %19 = vector.shape_cast %18 : vector<256xf32> to vector<256x1xf32>
    %cst_12 = arith.constant 1.600000e+01 : f32
    %20 = vector.broadcast %cst_12 : f32 to vector<256x1xf32>
    %21 = arith.divf %19, %20 : vector<256x1xf32>
    %22 = vector.extract_strided_slice %3 {offsets = [1, 0], sizes = [1, 16], strides = [1, 1]} : vector<4x16xf32> to vector<1x16xf32>
    %cst_13 = arith.constant 9.99999974E-6 : f32
    %23 = vector.broadcast %cst_13 : f32 to vector<256x1xf32>
    %24 = arith.addf %21, %23 : vector<256x1xf32>
    %25 = math.rsqrt %24 : vector<256x1xf32>
    %26 = vector.broadcast %22 : vector<1x16xf32> to vector<256x16xf32>
    %27 = vector.broadcast %25 : vector<256x1xf32> to vector<256x16xf32>
    %28 = arith.mulf %26, %27 : vector<256x16xf32>
    %29 = vector.broadcast %12 : vector<256x1xf32> to vector<256x16xf32>
    %30 = arith.subf %8, %29 : vector<256x16xf32>
    %31 = arith.mulf %30, %28 : vector<256x16xf32>
    %32 = vector.extract_strided_slice %3 {offsets = [2, 0], sizes = [1, 16], strides = [1, 1]} : vector<4x16xf32> to vector<1x16xf32>
    %33 = vector.broadcast %32 : vector<1x16xf32> to vector<256x16xf32>
    %34 = arith.addf %31, %33 : vector<256x16xf32>
    %cst_14 = arith.constant 0.000000e+00 : f32
    %35 = vector.broadcast %cst_14 : f32 to vector<256x16xf32>
    %36 = arith.maximumf %34, %35 : vector<256x16xf32>
    %37 = arith.truncf %2 : vector<256x16xf32> to vector<256x16xbf16>
    %c0_15 = arith.constant 0 : index
    %c0_16 = arith.constant 0 : index
    %38 = vector.load %arg5[%c0_15, %c0_16] : memref<16x16xbf16, #tpu.memory_space<vmem>>, vector<16x16xbf16>
    %cst_17 = arith.constant dense<0.000000e+00> : vector<256x16xf32>
    %39 = tpu.matmul %37, %38, %cst_17 {dimension_numbers = #tpu.dot_dimension_numbers<[1], [0], [0], [1], [0, 0, 1, 1], [], []>} : vector<256x16xbf16>, vector<16x16xbf16>, vector<256x16xf32> -> vector<256x16xf32>
    %40 = vector.extract_strided_slice %3 {offsets = [3, 0], sizes = [1, 16], strides = [1, 1]} : vector<4x16xf32> to vector<1x16xf32>
    %41 = vector.broadcast %40 : vector<1x16xf32> to vector<256x16xf32>
    %42 = arith.addf %39, %41 : vector<256x16xf32>
    %cst_18 = arith.constant 0.000000e+00 : f32
    %43 = vector.broadcast %cst_18 : f32 to vector<256x16xf32>
    %44 = arith.cmpf ogt, %42, %43 : vector<256x16xf32>
    %cst_19 = arith.constant 0.00999999977 : f32
    %45 = vector.broadcast %cst_19 : f32 to vector<256x16xf32>
    %46 = arith.mulf %45, %42 : vector<256x16xf32>
    %47 = arith.select %44, %42, %46 : vector<256x16xi1>, vector<256x16xf32>
    %48 = arith.addf %47, %36 : vector<256x16xf32>
    %49 = vector.broadcast %0 : f32 to vector<256x16xf32>
    %50 = arith.mulf %49, %48 : vector<256x16xf32>
    %51 = arith.addf %2, %50 : vector<256x16xf32>
    %c0_20 = arith.constant 0 : index
    %c0_21 = arith.constant 0 : index
    %52 = vector.load %arg7[%c0_20, %c0_21] : memref<256x16xf32, #tpu.memory_space<vmem>>, vector<256x16xf32>
    tpu.vector_store %arg7[%c0_20, %c0_21], %51 {strides = array<i32>} : memref<256x16xf32, #tpu.memory_space<vmem>>, vector<256x16xf32>,
    return
  }
  func.func @transform_0(%arg0: i32) -> (i32, i32) {
    %c0_i32 = arith.constant 0 : i32
    %c0_i32_0 = arith.constant 0 : i32
    %c0_i32_1 = arith.constant 0 : i32
    return %c0_i32, %c0_i32_0 : i32, i32
  }
  func.func @transform_1(%arg0: i32) -> (i32, i32) {
    %c0_i32 = arith.constant 0 : i32
    %c0_i32_0 = arith.constant 0 : i32
    return %arg0, %c0_i32 : i32, i32
  }
  func.func @transform_2(%arg0: i32) -> (i32, i32) {
    %c0_i32 = arith.constant 0 : i32
    %c0_i32_0 = arith.constant 0 : i32
    return %arg0, %c0_i32 : i32, i32
  }
  func.func @transform_3(%arg0: i32) -> (i32, i32) {
    %c0_i32 = arith.constant 0 : i32
    %c0_i32_0 = arith.constant 0 : i32
    %c0_i32_1 = arith.constant 0 : i32
    return %c0_i32, %c0_i32_0 : i32, i32
  }
  func.func @transform_4(%arg0: i32) -> (i32, i32) {
    %c0_i32 = arith.constant 0 : i32
    %c0_i32_0 = arith.constant 0 : i32
    %c0_i32_1 = arith.constant 0 : i32
    return %c0_i32, %c0_i32_0 : i32, i32
  }
  func.func @transform_5(%arg0: i32) -> (i32, i32) {
    %c0_i32 = arith.constant 0 : i32
    %c0_i32_0 = arith.constant 0 : i32
    %c0_i32_1 = arith.constant 0 : i32
    return %c0_i32, %c0_i32_0 : i32, i32
  }
  func.func @transform_6(%arg0: i32) -> (i32, i32) {
    %c0_i32 = arith.constant 0 : i32
    %c0_i32_0 = arith.constant 0 : i32
    return %arg0, %c0_i32 : i32, i32
  }
}

</mosaic_0001>

<llo_original>
// kernel: tpu_custom_call.1
$region0: #{tpu_custom_call.1}
  #allocation0 [shape = 'u32[]', space=smem, size = 0x4, offset = 0x4, fixed_abs, tag = 'smem constant byte address 0x4 - core index']
  #allocation1 [shape = 'u32[144,128]{1,0:T(1,128)}', space=vmem, size = 0x12000, scoped, tag = 'internal scratch']
  #allocation2 [shape = 'f32[1,1]{1,0:T(1,128)S(6)}', space=smem, size = 0x200, scoped, tag = 'scoped memory for tpu_custom_call.1']
  %s0 = inlined_call_operand.<no memory space> [shape: f32[1,1], index: 0, kind: input, shape index: {}]
  %s1 = inlined_call_operand.vmem [shape: bf16[512,32], index: 1, kind: input, shape index: {}]
  %s2 = inlined_call_operand.vmem [shape: f32[512,16], index: 2, kind: input, shape index: {}]
  %s3 = inlined_call_operand.vmem [shape: bf16[32,16], index: 3, kind: input, shape index: {}]
  %s4 = inlined_call_operand.vmem [shape: bf16[16,16], index: 4, kind: input, shape index: {}]
  %s5 = inlined_call_operand.vmem [shape: f32[4,16], index: 5, kind: input, shape index: {}]
  %s6 = inlined_call_operand.vmem [shape: f32[512,16], index: 6, kind: output, shape index: {}]
  %s7 = sld [smem:[#allocation0]]
  $region57: #{tpu_custom_call.1} parent=0
    _
  %s9 = ssub.s32 1, %s7
  %s10 = scalar_select 0, %s9, %s7
  %11 = sst [smem:[#allocation2]] %s0
  loop: start=0, step=1, limit=4
  $region2: #{tpu_custom_call.1} parent=0 // loop_pre_header
    _
  $region3: #{tpu_custom_call.1} parent=0 // loop_header
    %s13 = sphi 0, %s17
    %p14 = scmp.ge.s32.totalorder %s13, 4
    %s21 = sphi 0, %s21
    %s23 = sphi 0, %s21
    %s24 = sphi 0, %s23
    %s38 = sphi 0, %s24
    %s44 = sphi 0, %s46
    %s47 = sphi 0, %s44
    %s48 = sphi 0, %s47
    %s64 = sphi 0, %s48
    %s70 = sphi 0, %s72
    %s73 = sphi 0, %s70
    %s74 = sphi 0, %s73
    %s90 = sphi 0, %s74
    %s94 = sphi 0, %s94
    %s96 = sphi 0, %s94
    %s97 = sphi 0, %s96
    %s111 = sphi 0, %s97
    %s115 = sphi 0, %s115
    %s117 = sphi 0, %s115
    %s118 = sphi 0, %s117
    %s132 = sphi 0, %s118
    %s136 = sphi 0, %s136
    %s138 = sphi 0, %s136
    %s139 = sphi 0, %s138
    %s153 = sphi 0, %s139
    %s159 = sphi 0, %s161
    %s162 = sphi 0, %s159
    %s163 = sphi 0, %s162
    %s179 = sphi 0, %s163
  $region4: #{tpu_custom_call.1} parent=0 // loop_header_branch
    %16 = sbr.rel (%p14) target = $region8
  $region5: #{tpu_custom_call.1} parent=0 // loop_body
    %s18 = ssub.s32 %s13, 1
    %s19 = ssub.s32 %s13, 2
    %s20 = sadd.s32 %s13, 1
    %s22 = sadd.s32 %s21, 1
    %p25 = scmp.eq.s32.totalorder %s13, 1
    %p26 = scmp.ne.s32.totalorder %s21, %s23
    %p27 = scmp.eq.s32.totalorder %s13, 0
    %p28 = por %p26, %p27
    %p29 = scmp.ne.s32.totalorder %s21, %s23
    %p30 = scmp.eq.s32.totalorder %s18, 1
    %p31 = por %p29, %p30
    %p32 = scmp.ne.s32.totalorder %s23, %s24
    %p33 = scmp.eq.s32.totalorder %s18, 0
    %p34 = por %p32, %p33
    %p35 = scmp.ne.s32.totalorder %s23, %s24
    %p36 = scmp.eq.s32.totalorder %s19, 1
    %p37 = por %p35, %p36
    %p39 = scmp.ne.s32.totalorder %s24, %s38
    %p40 = scmp.eq.s32.totalorder %s19, 0
    %p41 = por %p39, %p40
    %s42 = ssub.s32 %s13, %s20
    %p43 = scmp.eq.s32.totalorder %s42, 0
    %s45 = sadd.s32 %s44, 1
    %s46 = scalar_select %p43, %s44, %s45
    %p49 = pneg %p43
    %p50 = scmp.eq.s32.totalorder %s13, 1
    %p51 = por %p49, %p50
    %p52 = scmp.ne.s32.totalorder %s44, %s47
    %p53 = scmp.eq.s32.totalorder %s13, 0
    %p54 = por %p52, %p53
    %p55 = scmp.ne.s32.totalorder %s44, %s47
    %p56 = scmp.eq.s32.totalorder %s18, 1
    %p57 = por %p55, %p56
    %p58 = scmp.ne.s32.totalorder %s47, %s48
    %p59 = scmp.eq.s32.totalorder %s18, 0
    %p60 = por %p58, %p59
    %p61 = scmp.ne.s32.totalorder %s47, %s48
    %p62 = scmp.eq.s32.totalorder %s19, 1
    %p63 = por %p61, %p62
    %p65 = scmp.ne.s32.totalorder %s48, %s64
    %p66 = scmp.eq.s32.totalorder %s19, 0
    %p67 = por %p65, %p66
    %s68 = ssub.s32 %s13, %s20
    %p69 = scmp.eq.s32.totalorder %s68, 0
    %s71 = sadd.s32 %s70, 1
    %s72 = scalar_select %p69, %s70, %s71
    %p75 = pneg %p69
    %p76 = scmp.eq.s32.totalorder %s13, 1
    %p77 = por %p75, %p76
    %p78 = scmp.ne.s32.totalorder %s70, %s73
    %p79 = scmp.eq.s32.totalorder %s13, 0
    %p80 = por %p78, %p79
    %p81 = scmp.ne.s32.totalorder %s70, %s73
    %p82 = scmp.eq.s32.totalorder %s18, 1
    %p83 = por %p81, %p82
    %p84 = scmp.ne.s32.totalorder %s73, %s74
    %p85 = scmp.eq.s32.totalorder %s18, 0
    %p86 = por %p84, %p85
    %p87 = scmp.ne.s32.totalorder %s73, %s74
    %p88 = scmp.eq.s32.totalorder %s19, 1
    %p89 = por %p87, %p88
    %p91 = scmp.ne.s32.totalorder %s74, %s90
    %p92 = scmp.eq.s32.totalorder %s19, 0
    %p93 = por %p91, %p92
    %s95 = sadd.s32 %s94, 1
    %p98 = scmp.eq.s32.totalorder %s13, 1
    %p99 = scmp.ne.s32.totalorder %s94, %s96
    %p100 = scmp.eq.s32.totalorder %s13, 0
    %p101 = por %p99, %p100
    %p102 = scmp.ne.s32.totalorder %s94, %s96
    %p103 = scmp.eq.s32.totalorder %s18, 1
    %p104 = por %p102, %p103
    %p105 = scmp.ne.s32.totalorder %s96, %s97
    %p106 = scmp.eq.s32.totalorder %s18, 0
    %p107 = por %p105, %p106
    %p108 = scmp.ne.s32.totalorder %s96, %s97
    %p109 = scmp.eq.s32.totalorder %s19, 1
    %p110 = por %p108, %p109
    %p112 = scmp.ne.s32.totalorder %s97, %s111
    %p113 = scmp.eq.s32.totalorder %s19, 0
    %p114 = por %p112, %p113
    %s116 = sadd.s32 %s115, 1
    %p119 = scmp.eq.s32.totalorder %s13, 1
    %p120 = scmp.ne.s32.totalorder %s115, %s117
    %p121 = scmp.eq.s32.totalorder %s13, 0
    %p122 = por %p120, %p121
    %p123 = scmp.ne.s32.totalorder %s115, %s117
    %p124 = scmp.eq.s32.totalorder %s18, 1
    %p125 = por %p123, %p124
    %p126 = scmp.ne.s32.totalorder %s117, %s118
    %p127 = scmp.eq.s32.totalorder %s18, 0
    %p128 = por %p126, %p127
    %p129 = scmp.ne.s32.totalorder %s117, %s118
    %p130 = scmp.eq.s32.totalorder %s19, 1
    %p131 = por %p129, %p130
    %p133 = scmp.ne.s32.totalorder %s118, %s132
    %p134 = scmp.eq.s32.totalorder %s19, 0
    %p135 = por %p133, %p134
    %s137 = sadd.s32 %s136, 1
    %p140 = scmp.eq.s32.totalorder %s13, 1
    %p141 = scmp.ne.s32.totalorder %s136, %s138
    %p142 = scmp.eq.s32.totalorder %s13, 0
    %p143 = por %p141, %p142
    %p144 = scmp.ne.s32.totalorder %s136, %s138
    %p145 = scmp.eq.s32.totalorder %s18, 1
    %p146 = por %p144, %p145
    %p147 = scmp.ne.s32.totalorder %s138, %s139
    %p148 = scmp.eq.s32.totalorder %s18, 0
    %p149 = por %p147, %p148
    %p150 = scmp.ne.s32.totalorder %s138, %s139
    %p151 = scmp.eq.s32.totalorder %s19, 1
    %p152 = por %p150, %p151
    %p154 = scmp.ne.s32.totalorder %s139, %s153
    %p155 = scmp.eq.s32.totalorder %s19, 0
    %p156 = por %p154, %p155
    %s157 = ssub.s32 %s13, %s20
    %p158 = scmp.eq.s32.totalorder %s157, 0
    %s160 = sadd.s32 %s159, 1
    %s161 = scalar_select %p158, %s159, %s160
    %p164 = pneg %p158
    %p165 = scmp.eq.s32.totalorder %s13, 1
    %p166 = por %p164, %p165
    %p167 = scmp.ne.s32.totalorder %s159, %s162
    %p168 = scmp.eq.s32.totalorder %s13, 0
    %p169 = por %p167, %p168
    %p170 = scmp.ne.s32.totalorder %s159, %s162
    %p171 = scmp.eq.s32.totalorder %s18, 1
    %p172 = por %p170, %p171
    %p173 = scmp.ne.s32.totalorder %s162, %s163
    %p174 = scmp.eq.s32.totalorder %s18, 0
    %p175 = por %p173, %p174
    %p176 = scmp.ne.s32.totalorder %s162, %s163
    %p177 = scmp.eq.s32.totalorder %s19, 1
    %p178 = por %p176, %p177
    %p180 = scmp.ne.s32.totalorder %s163, %s179
    %p181 = scmp.eq.s32.totalorder %s19, 0
    %p182 = por %p180, %p181
    %p183 = scmp.le.s32.totalorder 1, %s13
    %p184 = scmp.lt.s32.totalorder %s13, 3
    %p185 = pnand %p183, %p184
    %p186 = pneg %p185
    // Predicated region
    $region9: #{tpu_custom_call.1} parent=5 // pred_check
      _
    $region10: #{tpu_custom_call.1} parent=5 // pred_check_branch
      %188 = sbr.rel (%p185) target = $region12
    $region11: #{tpu_custom_call.1} parent=5 // pred_region
      %s189 = ssub.s32 %s13, 1
      // Predicated region
      $region13: #{tpu_custom_call.1} parent=11 // pred_check
        %p190 = pneg %p34
      $region14: #{tpu_custom_call.1} parent=11 // pred_check_branch
        %192 = sbr.rel (%p190) target = $region16
      $region15: #{tpu_custom_call.1} parent=11 // pred_region
        _
      $region16: #{tpu_custom_call.1} parent=11 // pred_fallthru
        _
      // Predicated region
      $region17: #{tpu_custom_call.1} parent=11 // pred_check
        %p193 = pneg %p107
      $region18: #{tpu_custom_call.1} parent=11 // pred_check_branch
        %195 = sbr.rel (%p193) target = $region20
      $region19: #{tpu_custom_call.1} parent=11 // pred_region
        _
      $region20: #{tpu_custom_call.1} parent=11 // pred_fallthru
        _
      // Predicated region
      $region21: #{tpu_custom_call.1} parent=11 // pred_check
        %p196 = pneg %p128
      $region22: #{tpu_custom_call.1} parent=11 // pred_check_branch
        %198 = sbr.rel (%p196) target = $region24
      $region23: #{tpu_custom_call.1} parent=11 // pred_region
        _
      $region24: #{tpu_custom_call.1} parent=11 // pred_fallthru
        _
      // Predicated region
      $region25: #{tpu_custom_call.1} parent=11 // pred_check
        %p199 = pneg %p149
      $region26: #{tpu_custom_call.1} parent=11 // pred_check_branch
        %201 = sbr.rel (%p199) target = $region28
      $region27: #{tpu_custom_call.1} parent=11 // pred_region
        _
      $region28: #{tpu_custom_call.1} parent=11 // pred_fallthru
        _
    $region12: #{tpu_custom_call.1} parent=5 // pred_fallthru
      _
    %p202 = scmp.lt.s32.totalorder %s13, 2
    // Predicated region
    $region29: #{tpu_custom_call.1} parent=5 // pred_check
      %p203 = pneg %p202
    $region30: #{tpu_custom_call.1} parent=5 // pred_check_branch
      %205 = sbr.rel (%p203) target = $region32
    $region31: #{tpu_custom_call.1} parent=5 // pred_region
      // Predicated region
      $region33: #{tpu_custom_call.1} parent=31 // pred_check
        %p206 = pneg %p54
      $region34: #{tpu_custom_call.1} parent=31 // pred_check_branch
        %208 = sbr.rel (%p206) target = $region36
      $region35: #{tpu_custom_call.1} parent=31 // pred_region
        %s209 = smul.u32 32, %s13
        %p210 = scmp.lt.s32.totalorder %s209, 63
        %s211 = scalar_select %p210, %s209, 63
        %s212 = smul.addr %s211, 4
        %s213 = scalar_lea.vmem %s1, %s212
        %s214 = smul.u32 32, %s13
      $region36: #{tpu_custom_call.1} parent=31 // pred_fallthru
        _
      // Predicated region
      $region37: #{tpu_custom_call.1} parent=31 // pred_check
        %p215 = pneg %p80
      $region38: #{tpu_custom_call.1} parent=31 // pred_check_branch
        %217 = sbr.rel (%p215) target = $region40
      $region39: #{tpu_custom_call.1} parent=31 // pred_region
        %s218 = smul.u32 32, %s13
        %p219 = scmp.lt.s32.totalorder %s218, 63
        %s220 = scalar_select %p219, %s218, 63
        %s221 = smul.addr %s220, 8
        %s222 = scalar_lea.vmem %s2, %s221
        %s223 = smul.u32 32, %s13
      $region40: #{tpu_custom_call.1} parent=31 // pred_fallthru
        _
    $region32: #{tpu_custom_call.1} parent=5 // pred_fallthru
      _
    %p224 = scmp.le.s32.totalorder 1, %s13
    %p225 = scmp.lt.s32.totalorder %s13, 3
    %p226 = pnand %p224, %p225
    %p227 = pneg %p226
    // Predicated region
    $region41: #{tpu_custom_call.1} parent=5 // pred_check
      _
    $region42: #{tpu_custom_call.1} parent=5 // pred_check_branch
      %229 = sbr.rel (%p226) target = $region44
    $region43: #{tpu_custom_call.1} parent=5 // pred_region
      %s230 = ssub.s32 %s13, 1
      %p231 = pneg %p34
      %p232 = pneg %p31
      %s233 = smul.u32 32, %s18
      %p234 = scmp.lt.s32.totalorder %s233, 63
      %s235 = scalar_select %p234, %s233, 63
      %s236 = smul.addr %s235, 4
      %s237 = scalar_lea.vmem %s1, %s236
      %p238 = pneg %p60
      %p239 = pneg %p57
      %s240 = smul.u32 32, %s18
      %p241 = scmp.lt.s32.totalorder %s240, 63
      %s242 = scalar_select %p241, %s240, 63
      %s243 = smul.addr %s242, 8
      %s244 = scalar_lea.vmem %s2, %s243
      %p245 = pneg %p86
      %p246 = pneg %p83
      %p247 = pneg %p107
      %p248 = pneg %p104
      %p249 = pneg %p128
      %p250 = pneg %p125
      %p251 = pneg %p149
      %p252 = pneg %p146
      %p253 = pneg %p175
      %p254 = pneg %p172
      %s255 = smul.u32 32, %s18
      %p256 = scmp.lt.s32.totalorder %s255, 63
      %s257 = scalar_select %p256, %s255, 63
      %s258 = smul.addr %s257, 8
      %s259 = scalar_lea.vmem %s6, %s258
      %s260 = smul.u32 32, %s18
      %p261 = scmp.lt.s32.totalorder %s260, 63
      %s262 = scalar_select %p261, %s260, 63
      %s263 = smul.addr %s262, 4
      %s264 = scalar_lea.vmem %s1, %s263
      %s265 = smul.u32 32, %s18
      %s266 = smul.u32 32, %s18
      %p267 = scmp.lt.s32.totalorder %s266, 63
      %s268 = scalar_select %p267, %s266, 63
      %s269 = smul.addr %s268, 8
      %s270 = scalar_lea.vmem %s2, %s269
      %s271 = smul.u32 32, %s18
      %s272 = smul.u32 32, %s18
      %p273 = scmp.lt.s32.totalorder %s272, 63
      %s274 = scalar_select %p273, %s272, 63
      %s275 = smul.addr %s274, 8
      %s276 = scalar_lea.vmem %s6, %s275
      %s277 = smul.u32 32, %s18
      %s279 = sld [smem:[#allocation2]]
      %v280 = vld [vmem:[%s264] sm:$0xf]
      %v281 = vld [vmem:[%s264 + $0x4] sm:$0xf]
      %v282 = vld [vmem:[%s264 + $0x8] sm:$0xf]
      %v283 = vld [vmem:[%s264 + $0xc] sm:$0xf]
      %v284 = vld [vmem:[%s264 + $0x10] sm:$0xf]
      %v285 = vld [vmem:[%s264 + $0x14] sm:$0xf]
      %v286 = vld [vmem:[%s264 + $0x18] sm:$0xf]
      %v287 = vld [vmem:[%s264 + $0x1c] sm:$0xf]
      %v288 = vld [vmem:[%s264 + $0x20] sm:$0xf]
      %v289 = vld [vmem:[%s264 + $0x24] sm:$0xf]
      %v290 = vld [vmem:[%s264 + $0x28] sm:$0xf]
      %v291 = vld [vmem:[%s264 + $0x2c] sm:$0xf]
      %v292 = vld [vmem:[%s264 + $0x30] sm:$0xf]
      %v293 = vld [vmem:[%s264 + $0x34] sm:$0xf]
      %v294 = vld [vmem:[%s264 + $0x38] sm:$0xf]
      %v295 = vld [vmem:[%s264 + $0x3c] sm:$0xf]
      %v296 = vld [vmem:[%s264 + $0x40] sm:$0xf]
      %v297 = vld [vmem:[%s264 + $0x44] sm:$0xf]
      %v298 = vld [vmem:[%s264 + $0x48] sm:$0xf]
      %v299 = vld [vmem:[%s264 + $0x4c] sm:$0xf]
      %v300 = vld [vmem:[%s264 + $0x50] sm:$0xf]
      %v301 = vld [vmem:[%s264 + $0x54] sm:$0xf]
      %v302 = vld [vmem:[%s264 + $0x58] sm:$0xf]
      %v303 = vld [vmem:[%s264 + $0x5c] sm:$0xf]
      %v304 = vld [vmem:[%s264 + $0x60] sm:$0xf]
      %v305 = vld [vmem:[%s264 + $0x64] sm:$0xf]
      %v306 = vld [vmem:[%s264 + $0x68] sm:$0xf]
      %v307 = vld [vmem:[%s264 + $0x6c] sm:$0xf]
      %v308 = vld [vmem:[%s264 + $0x70] sm:$0xf]
      %v309 = vld [vmem:[%s264 + $0x74] sm:$0xf]
      %v310 = vld [vmem:[%s264 + $0x78] sm:$0xf]
      %v311 = vld [vmem:[%s264 + $0x7c] sm:$0xf]
      %v312 = vld [vmem:[%s270] sm:$0xff]
      %v313 = vld [vmem:[%s270 + $0x8] sm:$0xff]
      %v314 = vld [vmem:[%s270 + $0x10] sm:$0xff]
      %v315 = vld [vmem:[%s270 + $0x18] sm:$0xff]
      %v316 = vld [vmem:[%s270 + $0x20] sm:$0xff]
      %v317 = vld [vmem:[%s270 + $0x28] sm:$0xff]
      %v318 = vld [vmem:[%s270 + $0x30] sm:$0xff]
      %v319 = vld [vmem:[%s270 + $0x38] sm:$0xff]
      %v320 = vld [vmem:[%s270 + $0x40] sm:$0xff]
      %v321 = vld [vmem:[%s270 + $0x48] sm:$0xff]
      %v322 = vld [vmem:[%s270 + $0x50] sm:$0xff]
      %v323 = vld [vmem:[%s270 + $0x58] sm:$0xff]
      %v324 = vld [vmem:[%s270 + $0x60] sm:$0xff]
      %v325 = vld [vmem:[%s270 + $0x68] sm:$0xff]
      %v326 = vld [vmem:[%s270 + $0x70] sm:$0xff]
      %v327 = vld [vmem:[%s270 + $0x78] sm:$0xff]
      %v328 = vld [vmem:[%s270 + $0x80] sm:$0xff]
      %v329 = vld [vmem:[%s270 + $0x88] sm:$0xff]
      %v330 = vld [vmem:[%s270 + $0x90] sm:$0xff]
      %v331 = vld [vmem:[%s270 + $0x98] sm:$0xff]
      %v332 = vld [vmem:[%s270 + $0xa0] sm:$0xff]
      %v333 = vld [vmem:[%s270 + $0xa8] sm:$0xff]
      %v334 = vld [vmem:[%s270 + $0xb0] sm:$0xff]
      %v335 = vld [vmem:[%s270 + $0xb8] sm:$0xff]
      %v336 = vld [vmem:[%s270 + $0xc0] sm:$0xff]
      %v337 = vld [vmem:[%s270 + $0xc8] sm:$0xff]
      %v338 = vld [vmem:[%s270 + $0xd0] sm:$0xff]
      %v339 = vld [vmem:[%s270 + $0xd8] sm:$0xff]
      %v340 = vld [vmem:[%s270 + $0xe0] sm:$0xff]
      %v341 = vld [vmem:[%s270 + $0xe8] sm:$0xff]
      %v342 = vld [vmem:[%s270 + $0xf0] sm:$0xff]
      %v343 = vld [vmem:[%s270 + $0xf8] sm:$0xff]
      %v344 = vld [vmem:[%s5] sm:$0xf]
      %v345 = vld [vmem:[%s3] sm:$0xf]
      %v346 = vld [vmem:[%s3 + $0x4] sm:$0xf]
      %v347 = vld [vmem:[%s3 + $0x8] sm:$0xf]
      %v348 = vld [vmem:[%s3 + $0xc] sm:$0xf]
      %v349 = vlaneseq
      %v350 = vshrl.u32 %v349, 7
      %v351 = vsub.s32 0, %v350
      %v352 = vrot.slane %v344, %v351
      %v385 = vunpack.c.l.b16 %v280
      %v386 = vunpack.c.l.b16 %v281
      %v387 = vunpack.c.l.b16 %v282
      %v388 = vunpack.c.l.b16 %v283
      %v389 = vunpack.c.l.b16 %v284
      %v390 = vunpack.c.l.b16 %v285
      %v391 = vunpack.c.l.b16 %v286
      %v392 = vunpack.c.l.b16 %v287
      %v393 = vunpack.c.l.b16 %v288
      %v394 = vunpack.c.l.b16 %v289
      %v395 = vunpack.c.l.b16 %v290
      %v396 = vunpack.c.l.b16 %v291
      %v397 = vunpack.c.l.b16 %v292
      %v398 = vunpack.c.l.b16 %v293
      %v399 = vunpack.c.l.b16 %v294
      %v400 = vunpack.c.l.b16 %v295
      %v401 = vunpack.c.l.b16 %v296
      %v402 = vunpack.c.l.b16 %v297
      %v403 = vunpack.c.l.b16 %v298
      %v404 = vunpack.c.l.b16 %v299
      %v405 = vunpack.c.l.b16 %v300
      %v406 = vunpack.c.l.b16 %v301
      %v407 = vunpack.c.l.b16 %v302
      %v408 = vunpack.c.l.b16 %v303
      %v409 = vunpack.c.l.b16 %v304
      %v410 = vunpack.c.l.b16 %v305
      %v411 = vunpack.c.l.b16 %v306
      %v412 = vunpack.c.l.b16 %v307
      %v413 = vunpack.c.l.b16 %v308
      %v414 = vunpack.c.l.b16 %v309
      %v415 = vunpack.c.l.b16 %v310
      %v416 = vunpack.c.l.b16 %v311
      %v417 = vpack.c.b16 %v386, %v385
      %v418 = vpack.c.b16 %v388, %v387
      %v419 = vpack.c.b16 %v390, %v389
      %v420 = vpack.c.b16 %v392, %v391
      %v421 = vpack.c.b16 %v394, %v393
      %v422 = vpack.c.b16 %v396, %v395
      %v423 = vpack.c.b16 %v398, %v397
      %v424 = vpack.c.b16 %v400, %v399
      %v425 = vpack.c.b16 %v402, %v401
      %v426 = vpack.c.b16 %v404, %v403
      %v427 = vpack.c.b16 %v406, %v405
      %v428 = vpack.c.b16 %v408, %v407
      %v429 = vpack.c.b16 %v410, %v409
      %v430 = vpack.c.b16 %v412, %v411
      %v431 = vpack.c.b16 %v414, %v413
      %v432 = vpack.c.b16 %v416, %v415
      %v437 = vunpack.c.l.b16 %v345
      %v438 = vunpack.c.l.b16 %v346
      %v439 = vunpack.c.l.b16 %v347
      %v440 = vunpack.c.l.b16 %v348
      %v441 = vpack.c.b16 %v438, %v437
      %v442 = vpack.c.b16 %v440, %v439
      %vm445 = vcmask 261120
      %v447 = vsel %vm445, %v417, 0
      %v450 = vsel %vm445, %v418, 0
      %v453 = vsel %vm445, %v419, 0
      %v456 = vsel %vm445, %v420, 0
      %v459 = vsel %vm445, %v421, 0
      %v462 = vsel %vm445, %v422, 0
      %v465 = vsel %vm445, %v423, 0
      %v468 = vsel %vm445, %v424, 0
      %v471 = vsel %vm445, %v425, 0
      %v474 = vsel %vm445, %v426, 0
      %v477 = vsel %vm445, %v427, 0
      %v480 = vsel %vm445, %v428, 0
      %v483 = vsel %vm445, %v429, 0
      %v486 = vsel %vm445, %v430, 0
      %v489 = vsel %vm445, %v431, 0
      %v492 = vsel %vm445, %v432, 0
      %494 = vmatprep.subr.bf16.mxu0 0
      %495 = vmatpush1.bf16.msra.mxu0 0
      %496 = vmatprep.subr.bf16.mxu0 0
      %497 = vmatpush1.bf16.msra.mxu0 0
      %498 = vmatprep.subr.bf16.mxu0 0
      %499 = vmatpush1.bf16.msra.mxu0 0
      %500 = vmatprep.subr.bf16.mxu0 0
      %501 = vmatpush1.bf16.msra.mxu0 0
      %502 = vmatprep.subr.bf16.mxu0 0
      %503 = vmatpush1.bf16.msra.mxu0 0
      %504 = vmatprep.subr.bf16.mxu0 0
      %505 = vmatpush1.bf16.msra.mxu0 0
      %506 = vmatprep.subr.bf16.mxu0 0
      %507 = vmatpush1.bf16.msra.mxu0 %v442
      %508 = vmatprep.subr.bf16.mxu0 0
      %509 = vmatpush1.bf16.msra.mxu0 %v441
      %510 = vmatprep.subr.bf16.mxu0 0
      %511 = vmatpush2.bf16.msra.mxu0 0
      %512 = vmatprep.subr.bf16.mxu0 0
      %513 = vmatpush2.bf16.msra.mxu0 0
      %514 = vmatprep.subr.bf16.mxu0 0
      %515 = vmatpush2.bf16.msra.mxu0 0
      %516 = vmatprep.subr.bf16.mxu0 0
      %517 = vmatpush2.bf16.msra.mxu0 0
      %518 = vmatprep.subr.bf16.mxu0 0
      %519 = vmatpush2.bf16.msra.mxu0 0
      %520 = vmatprep.subr.bf16.mxu0 0
      %521 = vmatpush2.bf16.msra.mxu0 0
      %522 = vmatprep.subr.bf16.mxu0 0
      %523 = vmatpush2.bf16.msra.mxu0 0
      %524 = vmatprep.subr.bf16.mxu0 0
      %525 = vmatpush2.bf16.msra.mxu0 0
      %526 = vmatprep.mubr.bf16.mxu0 0
      %527 = vmatmul.mubr.bf16.gmra.mxu0 %v447
      %v528 = vpop.f32.mrf.mxu0
      %v529 = vadd.f32 %v352, %v528
      %v530 = vpop.f32.mrf.mxu0
      %v531 = vpop.f32.mrf.mxu0
      %v532 = vadd.f32 %v352, %v531
      %v533 = vpop.f32.mrf.mxu0
      %534 = vmatprep.mubr.bf16.mxu0 0
      %535 = vmatmul.mubr.bf16.gmra.mxu0 %v450
      %v536 = vpop.f32.mrf.mxu0
      %v537 = vadd.f32 %v352, %v536
      %v538 = vpop.f32.mrf.mxu0
      %v539 = vpop.f32.mrf.mxu0
      %v540 = vadd.f32 %v352, %v539
      %v541 = vpop.f32.mrf.mxu0
      %542 = vmatprep.mubr.bf16.mxu0 0
      %543 = vmatmul.mubr.bf16.gmra.mxu0 %v453
      %v544 = vpop.f32.mrf.mxu0
      %v545 = vadd.f32 %v352, %v544
      %v546 = vpop.f32.mrf.mxu0
      %v547 = vpop.f32.mrf.mxu0
      %v548 = vadd.f32 %v352, %v547
      %v549 = vpop.f32.mrf.mxu0
      %550 = vmatprep.mubr.bf16.mxu0 0
      %551 = vmatmul.mubr.bf16.gmra.mxu0 %v456
      %v552 = vpop.f32.mrf.mxu0
      %v553 = vadd.f32 %v352, %v552
      %v554 = vpop.f32.mrf.mxu0
      %v555 = vpop.f32.mrf.mxu0
      %v556 = vadd.f32 %v352, %v555
      %v557 = vpop.f32.mrf.mxu0
      %558 = vmatprep.mubr.bf16.mxu0 0
      %559 = vmatmul.mubr.bf16.gmra.mxu0 %v459
      %v560 = vpop.f32.mrf.mxu0
      %v561 = vadd.f32 %v352, %v560
      %v562 = vpop.f32.mrf.mxu0
      %v563 = vpop.f32.mrf.mxu0
      %v564 = vadd.f32 %v352, %v563
      %v565 = vpop.f32.mrf.mxu0
      %566 = vmatprep.mubr.bf16.mxu0 0
      %567 = vmatmul.mubr.bf16.gmra.mxu0 %v462
      %v568 = vpop.f32.mrf.mxu0
      %v569 = vadd.f32 %v352, %v568
      %v570 = vpop.f32.mrf.mxu0
      %v571 = vpop.f32.mrf.mxu0
      %v572 = vadd.f32 %v352, %v571
      %v573 = vpop.f32.mrf.mxu0
      %574 = vmatprep.mubr.bf16.mxu0 0
      %575 = vmatmul.mubr.bf16.gmra.mxu0 %v465
      %v576 = vpop.f32.mrf.mxu0
      %v577 = vadd.f32 %v352, %v576
      %v578 = vpop.f32.mrf.mxu0
      %v579 = vpop.f32.mrf.mxu0
      %v580 = vadd.f32 %v352, %v579
      %v581 = vpop.f32.mrf.mxu0
      %582 = vmatprep.mubr.bf16.mxu0 0
      %583 = vmatmul.mubr.bf16.gmra.mxu0 %v468
      %v584 = vpop.f32.mrf.mxu0
      %v585 = vadd.f32 %v352, %v584
      %v586 = vpop.f32.mrf.mxu0
      %v587 = vpop.f32.mrf.mxu0
      %v588 = vadd.f32 %v352, %v587
      %v589 = vpop.f32.mrf.mxu0
      %590 = vmatprep.mubr.bf16.mxu0 0
      %591 = vmatmul.mubr.bf16.gmra.mxu0 %v471
      %v592 = vpop.f32.mrf.mxu0
      %v593 = vadd.f32 %v352, %v592
      %v594 = vpop.f32.mrf.mxu0
      %v595 = vpop.f32.mrf.mxu0
      %v596 = vadd.f32 %v352, %v595
      %v597 = vpop.f32.mrf.mxu0
      %598 = vmatprep.mubr.bf16.mxu0 0
      %599 = vmatmul.mubr.bf16.gmra.mxu0 %v474
      %v600 = vpop.f32.mrf.mxu0
      %v601 = vadd.f32 %v352, %v600
      %v602 = vpop.f32.mrf.mxu0
      %v603 = vpop.f32.mrf.mxu0
      %v604 = vadd.f32 %v352, %v603
      %v605 = vpop.f32.mrf.mxu0
      %606 = vmatprep.mubr.bf16.mxu0 0
      %607 = vmatmul.mubr.bf16.gmra.mxu0 %v477
      %v608 = vpop.f32.mrf.mxu0
      %v609 = vadd.f32 %v352, %v608
      %v610 = vpop.f32.mrf.mxu0
      %v611 = vpop.f32.mrf.mxu0
      %v612 = vadd.f32 %v352, %v611
      %v613 = vpop.f32.mrf.mxu0
      %614 = vmatprep.mubr.bf16.mxu0 0
      %615 = vmatmul.mubr.bf16.gmra.mxu0 %v480
      %v616 = vpop.f32.mrf.mxu0
      %v617 = vadd.f32 %v352, %v616
      %v618 = vpop.f32.mrf.mxu0
      %v619 = vpop.f32.mrf.mxu0
      %v620 = vadd.f32 %v352, %v619
      %v621 = vpop.f32.mrf.mxu0
      %622 = vmatprep.mubr.bf16.mxu0 0
      %623 = vmatmul.mubr.bf16.gmra.mxu0 %v483
      %v624 = vpop.f32.mrf.mxu0
      %v625 = vadd.f32 %v352, %v624
      %v626 = vpop.f32.mrf.mxu0
      %v627 = vpop.f32.mrf.mxu0
      %v628 = vadd.f32 %v352, %v627
      %v629 = vpop.f32.mrf.mxu0
      %630 = vmatprep.mubr.bf16.mxu0 0
      %631 = vmatmul.mubr.bf16.gmra.mxu0 %v486
      %v632 = vpop.f32.mrf.mxu0
      %v633 = vadd.f32 %v352, %v632
      %v634 = vpop.f32.mrf.mxu0
      %v635 = vpop.f32.mrf.mxu0
      %v636 = vadd.f32 %v352, %v635
      %v637 = vpop.f32.mrf.mxu0
      %638 = vmatprep.mubr.bf16.mxu0 0
      %639 = vmatmul.mubr.bf16.gmra.mxu0 %v489
      %v640 = vpop.f32.mrf.mxu0
      %v641 = vadd.f32 %v352, %v640
      %v642 = vpop.f32.mrf.mxu0
      %v643 = vpop.f32.mrf.mxu0
      %v644 = vadd.f32 %v352, %v643
      %v645 = vpop.f32.mrf.mxu0
      %646 = vmatprep.mubr.bf16.mxu0 0
      %647 = vmatmul.mubr.bf16.gmra.mxu0 %v492
      %v648 = vpop.f32.mrf.mxu0
      %v649 = vadd.f32 %v352, %v648
      %v650 = vpop.f32.mrf.mxu0
      %v651 = vpop.f32.mrf.mxu0
      %v652 = vadd.f32 %v352, %v651
      %v653 = vpop.f32.mrf.mxu0
      %654 = vdwg.mxu0
      %vm655 = vcmask 130048
      %v656 = vsel %vm655, %v529, 0.0
      %657 = vadd.xlane.f32.xlu0 %v656
      %v658 = vpop.xlane.xlu0 %657
      %v659 = vsel %vm655, %v532, 0.0
      %660 = vadd.xlane.f32.xlu0 %v659
      %v661 = vpop.xlane.xlu0 %660
      %v662 = vsel %vm655, %v537, 0.0
      %663 = vadd.xlane.f32.xlu0 %v662
      %v664 = vpop.xlane.xlu0 %663
      %v665 = vsel %vm655, %v540, 0.0
      %666 = vadd.xlane.f32.xlu0 %v665
      %v667 = vpop.xlane.xlu0 %666
      %v668 = vsel %vm655, %v545, 0.0
      %669 = vadd.xlane.f32.xlu0 %v668
      %v670 = vpop.xlane.xlu0 %669
      %v671 = vsel %vm655, %v548, 0.0
      %672 = vadd.xlane.f32.xlu0 %v671
      %v673 = vpop.xlane.xlu0 %672
      %v674 = vsel %vm655, %v553, 0.0
      %675 = vadd.xlane.f32.xlu0 %v674
      %v676 = vpop.xlane.xlu0 %675
      %v677 = vsel %vm655, %v556, 0.0
      %678 = vadd.xlane.f32.xlu0 %v677
      %v679 = vpop.xlane.xlu0 %678
      %v680 = vsel %vm655, %v561, 0.0
      %681 = vadd.xlane.f32.xlu0 %v680
      %v682 = vpop.xlane.xlu0 %681
      %v683 = vsel %vm655, %v564, 0.0
      %684 = vadd.xlane.f32.xlu0 %v683
      %v685 = vpop.xlane.xlu0 %684
      %v686 = vsel %vm655, %v569, 0.0
      %687 = vadd.xlane.f32.xlu0 %v686
      %v688 = vpop.xlane.xlu0 %687
      %v689 = vsel %vm655, %v572, 0.0
      %690 = vadd.xlane.f32.xlu0 %v689
      %v691 = vpop.xlane.xlu0 %690
      %v692 = vsel %vm655, %v577, 0.0
      %693 = vadd.xlane.f32.xlu0 %v692
      %v694 = vpop.xlane.xlu0 %693
      %v695 = vsel %vm655, %v580, 0.0
      %696 = vadd.xlane.f32.xlu0 %v695
      %v697 = vpop.xlane.xlu0 %696
      %v698 = vsel %vm655, %v585, 0.0
      %699 = vadd.xlane.f32.xlu0 %v698
      %v700 = vpop.xlane.xlu0 %699
      %v701 = vsel %vm655, %v588, 0.0
      %702 = vadd.xlane.f32.xlu0 %v701
      %v703 = vpop.xlane.xlu0 %702
      %v704 = vsel %vm655, %v593, 0.0
      %705 = vadd.xlane.f32.xlu0 %v704
      %v706 = vpop.xlane.xlu0 %705
      %v707 = vsel %vm655, %v596, 0.0
      %708 = vadd.xlane.f32.xlu0 %v707
      %v709 = vpop.xlane.xlu0 %708
      %v710 = vsel %vm655, %v601, 0.0
      %711 = vadd.xlane.f32.xlu0 %v710
      %v712 = vpop.xlane.xlu0 %711
      %v713 = vsel %vm655, %v604, 0.0
      %714 = vadd.xlane.f32.xlu0 %v713
      %v715 = vpop.xlane.xlu0 %714
      %v716 = vsel %vm655, %v609, 0.0
      %717 = vadd.xlane.f32.xlu0 %v716
      %v718 = vpop.xlane.xlu0 %717
      %v719 = vsel %vm655, %v612, 0.0
      %720 = vadd.xlane.f32.xlu0 %v719
      %v721 = vpop.xlane.xlu0 %720
      %v722 = vsel %vm655, %v617, 0.0
      %723 = vadd.xlane.f32.xlu0 %v722
      %v724 = vpop.xlane.xlu0 %723
      %v725 = vsel %vm655, %v620, 0.0
      %726 = vadd.xlane.f32.xlu0 %v725
      %v727 = vpop.xlane.xlu0 %726
      %v728 = vsel %vm655, %v625, 0.0
      %729 = vadd.xlane.f32.xlu0 %v728
      %v730 = vpop.xlane.xlu0 %729
      %v731 = vsel %vm655, %v628, 0.0
      %732 = vadd.xlane.f32.xlu0 %v731
      %v733 = vpop.xlane.xlu0 %732
      %v734 = vsel %vm655, %v633, 0.0
      %735 = vadd.xlane.f32.xlu0 %v734
      %v736 = vpop.xlane.xlu0 %735
      %v737 = vsel %vm655, %v636, 0.0
      %738 = vadd.xlane.f32.xlu0 %v737
      %v739 = vpop.xlane.xlu0 %738
      %v740 = vsel %vm655, %v641, 0.0
      %741 = vadd.xlane.f32.xlu0 %v740
      %v742 = vpop.xlane.xlu0 %741
      %v743 = vsel %vm655, %v644, 0.0
      %744 = vadd.xlane.f32.xlu0 %v743
      %v745 = vpop.xlane.xlu0 %744
      %v746 = vsel %vm655, %v649, 0.0
      %747 = vadd.xlane.f32.xlu0 %v746
      %v748 = vpop.xlane.xlu0 %747
      %v749 = vsel %vm655, %v652, 0.0
      %750 = vadd.xlane.f32.xlu0 %v749
      %v751 = vpop.xlane.xlu0 %750
      %v752 = vrcp.pop 16.0
      %v753 = vmul.f32 %v658, %v752
      %v754 = vmul.f32 %v661, %v752
      %v755 = vmul.f32 %v664, %v752
      %v756 = vmul.f32 %v667, %v752
      %v757 = vmul.f32 %v670, %v752
      %v758 = vmul.f32 %v673, %v752
      %v759 = vmul.f32 %v676, %v752
      %v760 = vmul.f32 %v679, %v752
      %v761 = vmul.f32 %v682, %v752
      %v762 = vmul.f32 %v685, %v752
      %v763 = vmul.f32 %v688, %v752
      %v764 = vmul.f32 %v691, %v752
      %v765 = vmul.f32 %v694, %v752
      %v766 = vmul.f32 %v697, %v752
      %v767 = vmul.f32 %v700, %v752
      %v768 = vmul.f32 %v703, %v752
      %v769 = vmul.f32 %v706, %v752
      %v770 = vmul.f32 %v709, %v752
      %v771 = vmul.f32 %v712, %v752
      %v772 = vmul.f32 %v715, %v752
      %v773 = vmul.f32 %v718, %v752
      %v774 = vmul.f32 %v721, %v752
      %v775 = vmul.f32 %v724, %v752
      %v776 = vmul.f32 %v727, %v752
      %v777 = vmul.f32 %v730, %v752
      %v778 = vmul.f32 %v733, %v752
      %v779 = vmul.f32 %v736, %v752
      %v780 = vmul.f32 %v739, %v752
      %v781 = vmul.f32 %v742, %v752
      %v782 = vmul.f32 %v745, %v752
      %v783 = vmul.f32 %v748, %v752
      %v784 = vmul.f32 %v751, %v752
      %v785 = vsub.f32 %v529, %v753
      %v786 = vsub.f32 %v532, %v754
      %v787 = vsub.f32 %v537, %v755
      %v788 = vsub.f32 %v540, %v756
      %v789 = vsub.f32 %v545, %v757
      %v790 = vsub.f32 %v548, %v758
      %v791 = vsub.f32 %v553, %v759
      %v792 = vsub.f32 %v556, %v760
      %v793 = vsub.f32 %v561, %v761
      %v794 = vsub.f32 %v564, %v762
      %v795 = vsub.f32 %v569, %v763
      %v796 = vsub.f32 %v572, %v764
      %v797 = vsub.f32 %v577, %v765
      %v798 = vsub.f32 %v580, %v766
      %v799 = vsub.f32 %v585, %v767
      %v800 = vsub.f32 %v588, %v768
      %v801 = vsub.f32 %v593, %v769
      %v802 = vsub.f32 %v596, %v770
      %v803 = vsub.f32 %v601, %v771
      %v804 = vsub.f32 %v604, %v772
      %v805 = vsub.f32 %v609, %v773
      %v806 = vsub.f32 %v612, %v774
      %v807 = vsub.f32 %v617, %v775
      %v808 = vsub.f32 %v620, %v776
      %v809 = vsub.f32 %v625, %v777
      %v810 = vsub.f32 %v628, %v778
      %v811 = vsub.f32 %v633, %v779
      %v812 = vsub.f32 %v636, %v780
      %v813 = vsub.f32 %v641, %v781
      %v814 = vsub.f32 %v644, %v782
      %v815 = vsub.f32 %v649, %v783
      %v816 = vsub.f32 %v652, %v784
      %v817 = vmul.f32 %v785, %v785
      %v818 = vmul.f32 %v786, %v786
      %v819 = vmul.f32 %v787, %v787
      %v820 = vmul.f32 %v788, %v788
      %v821 = vmul.f32 %v789, %v789
      %v822 = vmul.f32 %v790, %v790
      %v823 = vmul.f32 %v791, %v791
      %v824 = vmul.f32 %v792, %v792
      %v825 = vmul.f32 %v793, %v793
      %v826 = vmul.f32 %v794, %v794
      %v827 = vmul.f32 %v795, %v795
      %v828 = vmul.f32 %v796, %v796
      %v829 = vmul.f32 %v797, %v797
      %v830 = vmul.f32 %v798, %v798
      %v831 = vmul.f32 %v799, %v799
      %v832 = vmul.f32 %v800, %v800
      %v833 = vmul.f32 %v801, %v801
      %v834 = vmul.f32 %v802, %v802
      %v835 = vmul.f32 %v803, %v803
      %v836 = vmul.f32 %v804, %v804
      %v837 = vmul.f32 %v805, %v805
      %v838 = vmul.f32 %v806, %v806
      %v839 = vmul.f32 %v807, %v807
      %v840 = vmul.f32 %v808, %v808
      %v841 = vmul.f32 %v809, %v809
      %v842 = vmul.f32 %v810, %v810
      %v843 = vmul.f32 %v811, %v811
      %v844 = vmul.f32 %v812, %v812
      %v845 = vmul.f32 %v813, %v813
      %v846 = vmul.f32 %v814, %v814
      %v847 = vmul.f32 %v815, %v815
      %v848 = vmul.f32 %v816, %v816
      %v849 = vsel %vm655, %v817, 0.0
      %850 = vadd.xlane.f32.xlu0 %v849
      %v851 = vpop.xlane.xlu0 %850
      %v852 = vsel %vm655, %v818, 0.0
      %853 = vadd.xlane.f32.xlu0 %v852
      %v854 = vpop.xlane.xlu0 %853
      %v855 = vsel %vm655, %v819, 0.0
      %856 = vadd.xlane.f32.xlu0 %v855
      %v857 = vpop.xlane.xlu0 %856
      %v858 = vsel %vm655, %v820, 0.0
      %859 = vadd.xlane.f32.xlu0 %v858
      %v860 = vpop.xlane.xlu0 %859
      %v861 = vsel %vm655, %v821, 0.0
      %862 = vadd.xlane.f32.xlu0 %v861
      %v863 = vpop.xlane.xlu0 %862
      %v864 = vsel %vm655, %v822, 0.0
      %865 = vadd.xlane.f32.xlu0 %v864
      %v866 = vpop.xlane.xlu0 %865
      %v867 = vsel %vm655, %v823, 0.0
      %868 = vadd.xlane.f32.xlu0 %v867
      %v869 = vpop.xlane.xlu0 %868
      %v870 = vsel %vm655, %v824, 0.0
      %871 = vadd.xlane.f32.xlu0 %v870
      %v872 = vpop.xlane.xlu0 %871
      %v873 = vsel %vm655, %v825, 0.0
      %874 = vadd.xlane.f32.xlu0 %v873
      %v875 = vpop.xlane.xlu0 %874
      %v876 = vsel %vm655, %v826, 0.0
      %877 = vadd.xlane.f32.xlu0 %v876
      %v878 = vpop.xlane.xlu0 %877
      %v879 = vsel %vm655, %v827, 0.0
      %880 = vadd.xlane.f32.xlu0 %v879
      %v881 = vpop.xlane.xlu0 %880
      %v882 = vsel %vm655, %v828, 0.0
      %883 = vadd.xlane.f32.xlu0 %v882
      %v884 = vpop.xlane.xlu0 %883
      %v885 = vsel %vm655, %v829, 0.0
      %886 = vadd.xlane.f32.xlu0 %v885
      %v887 = vpop.xlane.xlu0 %886
      %v888 = vsel %vm655, %v830, 0.0
      %889 = vadd.xlane.f32.xlu0 %v888
      %v890 = vpop.xlane.xlu0 %889
      %v891 = vsel %vm655, %v831, 0.0
      %892 = vadd.xlane.f32.xlu0 %v891
      %v893 = vpop.xlane.xlu0 %892
      %v894 = vsel %vm655, %v832, 0.0
      %895 = vadd.xlane.f32.xlu0 %v894
      %v896 = vpop.xlane.xlu0 %895
      %v897 = vsel %vm655, %v833, 0.0
      %898 = vadd.xlane.f32.xlu0 %v897
      %v899 = vpop.xlane.xlu0 %898
      %v900 = vsel %vm655, %v834, 0.0
      %901 = vadd.xlane.f32.xlu0 %v900
      %v902 = vpop.xlane.xlu0 %901
      %v903 = vsel %vm655, %v835, 0.0
      %904 = vadd.xlane.f32.xlu0 %v903
      %v905 = vpop.xlane.xlu0 %904
      %v906 = vsel %vm655, %v836, 0.0
      %907 = vadd.xlane.f32.xlu0 %v906
      %v908 = vpop.xlane.xlu0 %907
      %v909 = vsel %vm655, %v837, 0.0
      %910 = vadd.xlane.f32.xlu0 %v909
      %v911 = vpop.xlane.xlu0 %910
      %v912 = vsel %vm655, %v838, 0.0
      %913 = vadd.xlane.f32.xlu0 %v912
      %v914 = vpop.xlane.xlu0 %913
      %v915 = vsel %vm655, %v839, 0.0
      %916 = vadd.xlane.f32.xlu0 %v915
      %v917 = vpop.xlane.xlu0 %916
      %v918 = vsel %vm655, %v840, 0.0
      %919 = vadd.xlane.f32.xlu0 %v918
      %v920 = vpop.xlane.xlu0 %919
      %v921 = vsel %vm655, %v841, 0.0
      %922 = vadd.xlane.f32.xlu0 %v921
      %v923 = vpop.xlane.xlu0 %922
      %v924 = vsel %vm655, %v842, 0.0
      %925 = vadd.xlane.f32.xlu0 %v924
      %v926 = vpop.xlane.xlu0 %925
      %v927 = vsel %vm655, %v843, 0.0
      %928 = vadd.xlane.f32.xlu0 %v927
      %v929 = vpop.xlane.xlu0 %928
      %v930 = vsel %vm655, %v844, 0.0
      %931 = vadd.xlane.f32.xlu0 %v930
      %v932 = vpop.xlane.xlu0 %931
      %v933 = vsel %vm655, %v845, 0.0
      %934 = vadd.xlane.f32.xlu0 %v933
      %v935 = vpop.xlane.xlu0 %934
      %v936 = vsel %vm655, %v846, 0.0
      %937 = vadd.xlane.f32.xlu0 %v936
      %v938 = vpop.xlane.xlu0 %937
      %v939 = vsel %vm655, %v847, 0.0
      %940 = vadd.xlane.f32.xlu0 %v939
      %v941 = vpop.xlane.xlu0 %940
      %v942 = vsel %vm655, %v848, 0.0
      %943 = vadd.xlane.f32.xlu0 %v942
      %v944 = vpop.xlane.xlu0 %943
      %v945 = vmul.f32 %v851, %v752
      %v946 = vmul.f32 %v854, %v752
      %v947 = vmul.f32 %v857, %v752
      %v948 = vmul.f32 %v860, %v752
      %v949 = vmul.f32 %v863, %v752
      %v950 = vmul.f32 %v866, %v752
      %v951 = vmul.f32 %v869, %v752
      %v952 = vmul.f32 %v872, %v752
      %v953 = vmul.f32 %v875, %v752
      %v954 = vmul.f32 %v878, %v752
      %v955 = vmul.f32 %v881, %v752
      %v956 = vmul.f32 %v884, %v752
      %v957 = vmul.f32 %v887, %v752
      %v958 = vmul.f32 %v890, %v752
      %v959 = vmul.f32 %v893, %v752
      %v960 = vmul.f32 %v896, %v752
      %v961 = vmul.f32 %v899, %v752
      %v962 = vmul.f32 %v902, %v752
      %v963 = vmul.f32 %v905, %v752
      %v964 = vmul.f32 %v908, %v752
      %v965 = vmul.f32 %v911, %v752
      %v966 = vmul.f32 %v914, %v752
      %v967 = vmul.f32 %v917, %v752
      %v968 = vmul.f32 %v920, %v752
      %v969 = vmul.f32 %v923, %v752
      %v970 = vmul.f32 %v926, %v752
      %v971 = vmul.f32 %v929, %v752
      %v972 = vmul.f32 %v932, %v752
      %v973 = vmul.f32 %v935, %v752
      %v974 = vmul.f32 %v938, %v752
      %v975 = vmul.f32 %v941, %v752
      %v976 = vmul.f32 %v944, %v752
      %v977 = vadd.f32 %v945, 1e-05
      %v978 = vadd.f32 %v946, 1e-05
      %v979 = vadd.f32 %v947, 1e-05
      %v980 = vadd.f32 %v948, 1e-05
      %v981 = vadd.f32 %v949, 1e-05
      %v982 = vadd.f32 %v950, 1e-05
      %v983 = vadd.f32 %v951, 1e-05
      %v984 = vadd.f32 %v952, 1e-05
      %v985 = vadd.f32 %v953, 1e-05
      %v986 = vadd.f32 %v954, 1e-05
      %v987 = vadd.f32 %v955, 1e-05
      %v988 = vadd.f32 %v956, 1e-05
      %v989 = vadd.f32 %v957, 1e-05
      %v990 = vadd.f32 %v958, 1e-05
      %v991 = vadd.f32 %v959, 1e-05
      %v992 = vadd.f32 %v960, 1e-05
      %v993 = vadd.f32 %v961, 1e-05
      %v994 = vadd.f32 %v962, 1e-05
      %v995 = vadd.f32 %v963, 1e-05
      %v996 = vadd.f32 %v964, 1e-05
      %v997 = vadd.f32 %v965, 1e-05
      %v998 = vadd.f32 %v966, 1e-05
      %v999 = vadd.f32 %v967, 1e-05
      %v1000 = vadd.f32 %v968, 1e-05
      %v1001 = vadd.f32 %v969, 1e-05
      %v1002 = vadd.f32 %v970, 1e-05
      %v1003 = vadd.f32 %v971, 1e-05
      %v1004 = vadd.f32 %v972, 1e-05
      %v1005 = vadd.f32 %v973, 1e-05
      %v1006 = vadd.f32 %v974, 1e-05
      %v1007 = vadd.f32 %v975, 1e-05
      %v1008 = vadd.f32 %v976, 1e-05
      %v1009 = vrsqrt.pop %v977
      %v1010 = vrsqrt.pop %v978
      %v1011 = vrsqrt.pop %v979
      %v1012 = vrsqrt.pop %v980
      %v1013 = vrsqrt.pop %v981
      %v1014 = vrsqrt.pop %v982
      %v1015 = vrsqrt.pop %v983
      %v1016 = vrsqrt.pop %v984
      %v1017 = vrsqrt.pop %v985
      %v1018 = vrsqrt.pop %v986
      %v1019 = vrsqrt.pop %v987
      %v1020 = vrsqrt.pop %v988
      %v1021 = vrsqrt.pop %v989
      %v1022 = vrsqrt.pop %v990
      %v1023 = vrsqrt.pop %v991
      %v1024 = vrsqrt.pop %v992
      %v1025 = vrsqrt.pop %v993
      %v1026 = vrsqrt.pop %v994
      %v1027 = vrsqrt.pop %v995
      %v1028 = vrsqrt.pop %v996
      %v1029 = vrsqrt.pop %v997
      %v1030 = vrsqrt.pop %v998
      %v1031 = vrsqrt.pop %v999
      %v1032 = vrsqrt.pop %v1000
      %v1033 = vrsqrt.pop %v1001
      %v1034 = vrsqrt.pop %v1002
      %v1035 = vrsqrt.pop %v1003
      %v1036 = vrsqrt.pop %v1004
      %v1037 = vrsqrt.pop %v1005
      %v1038 = vrsqrt.pop %v1006
      %v1039 = vrsqrt.pop %v1007
      %v1040 = vrsqrt.pop %v1008
      %v1041 = vlaneseq
      %v1042 = vshrl.u32 %v1041, 7
      %v1043 = vsub.s32 1, %v1042
      %v1044 = vrot.slane %v344, %v1043
      %v1045 = vmul.f32 %v1044, %v1009
      %v1046 = vmul.f32 %v1044, %v1010
      %v1047 = vmul.f32 %v1044, %v1011
      %v1048 = vmul.f32 %v1044, %v1012
      %v1049 = vmul.f32 %v1044, %v1013
      %v1050 = vmul.f32 %v1044, %v1014
      %v1051 = vmul.f32 %v1044, %v1015
      %v1052 = vmul.f32 %v1044, %v1016
      %v1053 = vmul.f32 %v1044, %v1017
      %v1054 = vmul.f32 %v1044, %v1018
      %v1055 = vmul.f32 %v1044, %v1019
      %v1056 = vmul.f32 %v1044, %v1020
      %v1057 = vmul.f32 %v1044, %v1021
      %v1058 = vmul.f32 %v1044, %v1022
      %v1059 = vmul.f32 %v1044, %v1023
      %v1060 = vmul.f32 %v1044, %v1024
      %v1061 = vmul.f32 %v1044, %v1025
      %v1062 = vmul.f32 %v1044, %v1026
      %v1063 = vmul.f32 %v1044, %v1027
      %v1064 = vmul.f32 %v1044, %v1028
      %v1065 = vmul.f32 %v1044, %v1029
      %v1066 = vmul.f32 %v1044, %v1030
      %v1067 = vmul.f32 %v1044, %v1031
      %v1068 = vmul.f32 %v1044, %v1032
      %v1069 = vmul.f32 %v1044, %v1033
      %v1070 = vmul.f32 %v1044, %v1034
      %v1071 = vmul.f32 %v1044, %v1035
      %v1072 = vmul.f32 %v1044, %v1036
      %v1073 = vmul.f32 %v1044, %v1037
      %v1074 = vmul.f32 %v1044, %v1038
      %v1075 = vmul.f32 %v1044, %v1039
      %v1076 = vmul.f32 %v1044, %v1040
      %v1077 = vmul.f32 %v785, %v1045
      %v1078 = vmul.f32 %v786, %v1046
      %v1079 = vmul.f32 %v787, %v1047
      %v1080 = vmul.f32 %v788, %v1048
      %v1081 = vmul.f32 %v789, %v1049
      %v1082 = vmul.f32 %v790, %v1050
      %v1083 = vmul.f32 %v791, %v1051
      %v1084 = vmul.f32 %v792, %v1052
      %v1085 = vmul.f32 %v793, %v1053
      %v1086 = vmul.f32 %v794, %v1054
      %v1087 = vmul.f32 %v795, %v1055
      %v1088 = vmul.f32 %v796, %v1056
      %v1089 = vmul.f32 %v797, %v1057
      %v1090 = vmul.f32 %v798, %v1058
      %v1091 = vmul.f32 %v799, %v1059
      %v1092 = vmul.f32 %v800, %v1060
      %v1093 = vmul.f32 %v801, %v1061
      %v1094 = vmul.f32 %v802, %v1062
      %v1095 = vmul.f32 %v803, %v1063
      %v1096 = vmul.f32 %v804, %v1064
      %v1097 = vmul.f32 %v805, %v1065
      %v1098 = vmul.f32 %v806, %v1066
      %v1099 = vmul.f32 %v807, %v1067
      %v1100 = vmul.f32 %v808, %v1068
      %v1101 = vmul.f32 %v809, %v1069
      %v1102 = vmul.f32 %v810, %v1070
      %v1103 = vmul.f32 %v811, %v1071
      %v1104 = vmul.f32 %v812, %v1072
      %v1105 = vmul.f32 %v813, %v1073
      %v1106 = vmul.f32 %v814, %v1074
      %v1107 = vmul.f32 %v815, %v1075
      %v1108 = vmul.f32 %v816, %v1076
      %v1109 = vlaneseq
      %v1110 = vshrl.u32 %v1109, 7
      %v1111 = vsub.s32 2, %v1110
      %v1112 = vrot.slane %v344, %v1111
      %v1113 = vadd.f32 %v1077, %v1112
      %v1114 = vadd.f32 %v1078, %v1112
      %v1115 = vadd.f32 %v1079, %v1112
      %v1116 = vadd.f32 %v1080, %v1112
      %v1117 = vadd.f32 %v1081, %v1112
      %v1118 = vadd.f32 %v1082, %v1112
      %v1119 = vadd.f32 %v1083, %v1112
      %v1120 = vadd.f32 %v1084, %v1112
      %v1121 = vadd.f32 %v1085, %v1112
      %v1122 = vadd.f32 %v1086, %v1112
      %v1123 = vadd.f32 %v1087, %v1112
      %v1124 = vadd.f32 %v1088, %v1112
      %v1125 = vadd.f32 %v1089, %v1112
      %v1126 = vadd.f32 %v1090, %v1112
      %v1127 = vadd.f32 %v1091, %v1112
      %v1128 = vadd.f32 %v1092, %v1112
      %v1129 = vadd.f32 %v1093, %v1112
      %v1130 = vadd.f32 %v1094, %v1112
      %v1131 = vadd.f32 %v1095, %v1112
      %v1132 = vadd.f32 %v1096, %v1112
      %v1133 = vadd.f32 %v1097, %v1112
      %v1134 = vadd.f32 %v1098, %v1112
      %v1135 = vadd.f32 %v1099, %v1112
      %v1136 = vadd.f32 %v1100, %v1112
      %v1137 = vadd.f32 %v1101, %v1112
      %v1138 = vadd.f32 %v1102, %v1112
      %v1139 = vadd.f32 %v1103, %v1112
      %v1140 = vadd.f32 %v1104, %v1112
      %v1141 = vadd.f32 %v1105, %v1112
      %v1142 = vadd.f32 %v1106, %v1112
      %v1143 = vadd.f32 %v1107, %v1112
      %v1144 = vadd.f32 %v1108, %v1112
      %v1145 = vmax.f32 %v1113, 0.0
      %v1146 = vmax.f32 %v1114, 0.0
      %v1147 = vmax.f32 %v1115, 0.0
      %v1148 = vmax.f32 %v1116, 0.0
      %v1149 = vmax.f32 %v1117, 0.0
      %v1150 = vmax.f32 %v1118, 0.0
      %v1151 = vmax.f32 %v1119, 0.0
      %v1152 = vmax.f32 %v1120, 0.0
      %v1153 = vmax.f32 %v1121, 0.0
      %v1154 = vmax.f32 %v1122, 0.0
      %v1155 = vmax.f32 %v1123, 0.0
      %v1156 = vmax.f32 %v1124, 0.0
      %v1157 = vmax.f32 %v1125, 0.0
      %v1158 = vmax.f32 %v1126, 0.0
      %v1159 = vmax.f32 %v1127, 0.0
      %v1160 = vmax.f32 %v1128, 0.0
      %v1161 = vmax.f32 %v1129, 0.0
      %v1162 = vmax.f32 %v1130, 0.0
      %v1163 = vmax.f32 %v1131, 0.0
      %v1164 = vmax.f32 %v1132, 0.0
      %v1165 = vmax.f32 %v1133, 0.0
      %v1166 = vmax.f32 %v1134, 0.0
      %v1167 = vmax.f32 %v1135, 0.0
      %v1168 = vmax.f32 %v1136, 0.0
      %v1169 = vmax.f32 %v1137, 0.0
      %v1170 = vmax.f32 %v1138, 0.0
      %v1171 = vmax.f32 %v1139, 0.0
      %v1172 = vmax.f32 %v1140, 0.0
      %v1173 = vmax.f32 %v1141, 0.0
      %v1174 = vmax.f32 %v1142, 0.0
      %v1175 = vmax.f32 %v1143, 0.0
      %v1176 = vmax.f32 %v1144, 0.0
      %v1177 = vpack.c.bf16 %v313, %v312
      %v1178 = vpack.c.bf16 %v315, %v314
      %v1179 = vpack.c.bf16 %v317, %v316
      %v1180 = vpack.c.bf16 %v319, %v318
      %v1181 = vpack.c.bf16 %v321, %v320
      %v1182 = vpack.c.bf16 %v323, %v322
      %v1183 = vpack.c.bf16 %v325, %v324
      %v1184 = vpack.c.bf16 %v327, %v326
      %v1185 = vpack.c.bf16 %v329, %v328
      %v1186 = vpack.c.bf16 %v331, %v330
      %v1187 = vpack.c.bf16 %v333, %v332
      %v1188 = vpack.c.bf16 %v335, %v334
      %v1189 = vpack.c.bf16 %v337, %v336
      %v1190 = vpack.c.bf16 %v339, %v338
      %v1191 = vpack.c.bf16 %v341, %v340
      %v1192 = vpack.c.bf16 %v343, %v342
      %v1193 = vld [vmem:[%s4] sm:$0xf]
      %v1194 = vld [vmem:[%s4 + $0x4] sm:$0xf]
      %v1195 = vlaneseq
      %v1196 = vshrl.u32 %v1195, 7
      %v1197 = vsub.s32 3, %v1196
      %v1198 = vrot.slane %v344, %v1197
      %v1201 = vunpack.c.l.b16 %v1193
      %v1202 = vunpack.c.l.b16 %v1194
      %v1203 = vpack.c.b16 %v1202, %v1201
      %v1206 = vsel %vm655, %v1177, 0
      %v1209 = vsel %vm655, %v1178, 0
      %v1212 = vsel %vm655, %v1179, 0
      %v1215 = vsel %vm655, %v1180, 0
      %v1218 = vsel %vm655, %v1181, 0
      %v1221 = vsel %vm655, %v1182, 0
      %v1224 = vsel %vm655, %v1183, 0
      %v1227 = vsel %vm655, %v1184, 0
      %v1230 = vsel %vm655, %v1185, 0
      %v1233 = vsel %vm655, %v1186, 0
      %v1236 = vsel %vm655, %v1187, 0
      %v1239 = vsel %vm655, %v1188, 0
      %v1242 = vsel %vm655, %v1189, 0
      %v1245 = vsel %vm655, %v1190, 0
      %v1248 = vsel %vm655, %v1191, 0
      %v1251 = vsel %vm655, %v1192, 0
      %1253 = vmatprep.subr.bf16.mxu0 0
      %1254 = vmatpush1.bf16.msra.mxu0 0
      %1255 = vmatprep.subr.bf16.mxu0 0
      %1256 = vmatpush1.bf16.msra.mxu0 0
      %1257 = vmatprep.subr.bf16.mxu0 0
      %1258 = vmatpush1.bf16.msra.mxu0 0
      %1259 = vmatprep.subr.bf16.mxu0 0
      %1260 = vmatpush1.bf16.msra.mxu0 0
      %1261 = vmatprep.subr.bf16.mxu0 0
      %1262 = vmatpush1.bf16.msra.mxu0 0
      %1263 = vmatprep.subr.bf16.mxu0 0
      %1264 = vmatpush1.bf16.msra.mxu0 0
      %1265 = vmatprep.subr.bf16.mxu0 0
      %1266 = vmatpush1.bf16.msra.mxu0 0
      %1267 = vmatprep.subr.bf16.mxu0 0
      %1268 = vmatpush1.bf16.msra.mxu0 %v1203
      %1269 = vmatprep.subr.bf16.mxu0 0
      %1270 = vmatpush2.bf16.msra.mxu0 0
      %1271 = vmatprep.subr.bf16.mxu0 0
      %1272 = vmatpush2.bf16.msra.mxu0 0
      %1273 = vmatprep.subr.bf16.mxu0 0
      %1274 = vmatpush2.bf16.msra.mxu0 0
      %1275 = vmatprep.subr.bf16.mxu0 0
      %1276 = vmatpush2.bf16.msra.mxu0 0
      %1277 = vmatprep.subr.bf16.mxu0 0
      %1278 = vmatpush2.bf16.msra.mxu0 0
      %1279 = vmatprep.subr.bf16.mxu0 0
      %1280 = vmatpush2.bf16.msra.mxu0 0
      %1281 = vmatprep.subr.bf16.mxu0 0
      %1282 = vmatpush2.bf16.msra.mxu0 0
      %1283 = vmatprep.subr.bf16.mxu0 0
      %1284 = vmatpush2.bf16.msra.mxu0 0
      %1285 = vmatprep.mubr.bf16.mxu0 0
      %1286 = vmatmul.mubr.bf16.gmra.mxu0 %v1206
      %v1287 = vpop.f32.mrf.mxu0
      %v1288 = vadd.f32 %v1198, %v1287
      %v1289 = vpop.f32.mrf.mxu0
      %v1290 = vpop.f32.mrf.mxu0
      %v1291 = vadd.f32 %v1198, %v1290
      %v1292 = vpop.f32.mrf.mxu0
      %1293 = vmatprep.mubr.bf16.mxu0 0
      %1294 = vmatmul.mubr.bf16.gmra.mxu0 %v1209
      %v1295 = vpop.f32.mrf.mxu0
      %v1296 = vadd.f32 %v1198, %v1295
      %v1297 = vpop.f32.mrf.mxu0
      %v1298 = vpop.f32.mrf.mxu0
      %v1299 = vadd.f32 %v1198, %v1298
      %v1300 = vpop.f32.mrf.mxu0
      %1301 = vmatprep.mubr.bf16.mxu0 0
      %1302 = vmatmul.mubr.bf16.gmra.mxu0 %v1212
      %v1303 = vpop.f32.mrf.mxu0
      %v1304 = vadd.f32 %v1198, %v1303
      %v1305 = vpop.f32.mrf.mxu0
      %v1306 = vpop.f32.mrf.mxu0
      %v1307 = vadd.f32 %v1198, %v1306
      %v1308 = vpop.f32.mrf.mxu0
      %1309 = vmatprep.mubr.bf16.mxu0 0
      %1310 = vmatmul.mubr.bf16.gmra.mxu0 %v1215
      %v1311 = vpop.f32.mrf.mxu0
      %v1312 = vadd.f32 %v1198, %v1311
      %v1313 = vpop.f32.mrf.mxu0
      %v1314 = vpop.f32.mrf.mxu0
      %v1315 = vadd.f32 %v1198, %v1314
      %v1316 = vpop.f32.mrf.mxu0
      %1317 = vmatprep.mubr.bf16.mxu0 0
      %1318 = vmatmul.mubr.bf16.gmra.mxu0 %v1218
      %v1319 = vpop.f32.mrf.mxu0
      %v1320 = vadd.f32 %v1198, %v1319
      %v1321 = vpop.f32.mrf.mxu0
      %v1322 = vpop.f32.mrf.mxu0
      %v1323 = vadd.f32 %v1198, %v1322
      %v1324 = vpop.f32.mrf.mxu0
      %1325 = vmatprep.mubr.bf16.mxu0 0
      %1326 = vmatmul.mubr.bf16.gmra.mxu0 %v1221
      %v1327 = vpop.f32.mrf.mxu0
      %v1328 = vadd.f32 %v1198, %v1327
      %v1329 = vpop.f32.mrf.mxu0
      %v1330 = vpop.f32.mrf.mxu0
      %v1331 = vadd.f32 %v1198, %v1330
      %v1332 = vpop.f32.mrf.mxu0
      %1333 = vmatprep.mubr.bf16.mxu0 0
      %1334 = vmatmul.mubr.bf16.gmra.mxu0 %v1224
      %v1335 = vpop.f32.mrf.mxu0
      %v1336 = vadd.f32 %v1198, %v1335
      %v1337 = vpop.f32.mrf.mxu0
      %v1338 = vpop.f32.mrf.mxu0
      %v1339 = vadd.f32 %v1198, %v1338
      %v1340 = vpop.f32.mrf.mxu0
      %1341 = vmatprep.mubr.bf16.mxu0 0
      %1342 = vmatmul.mubr.bf16.gmra.mxu0 %v1227
      %v1343 = vpop.f32.mrf.mxu0
      %v1344 = vadd.f32 %v1198, %v1343
      %v1345 = vpop.f32.mrf.mxu0
      %v1346 = vpop.f32.mrf.mxu0
      %v1347 = vadd.f32 %v1198, %v1346
      %v1348 = vpop.f32.mrf.mxu0
      %1349 = vmatprep.mubr.bf16.mxu0 0
      %1350 = vmatmul.mubr.bf16.gmra.mxu0 %v1230
      %v1351 = vpop.f32.mrf.mxu0
      %v1352 = vadd.f32 %v1198, %v1351
      %v1353 = vpop.f32.mrf.mxu0
      %v1354 = vpop.f32.mrf.mxu0
      %v1355 = vadd.f32 %v1198, %v1354
      %v1356 = vpop.f32.mrf.mxu0
      %1357 = vmatprep.mubr.bf16.mxu0 0
      %1358 = vmatmul.mubr.bf16.gmra.mxu0 %v1233
      %v1359 = vpop.f32.mrf.mxu0
      %v1360 = vadd.f32 %v1198, %v1359
      %v1361 = vpop.f32.mrf.mxu0
      %v1362 = vpop.f32.mrf.mxu0
      %v1363 = vadd.f32 %v1198, %v1362
      %v1364 = vpop.f32.mrf.mxu0
      %1365 = vmatprep.mubr.bf16.mxu0 0
      %1366 = vmatmul.mubr.bf16.gmra.mxu0 %v1236
      %v1367 = vpop.f32.mrf.mxu0
      %v1368 = vadd.f32 %v1198, %v1367
      %v1369 = vpop.f32.mrf.mxu0
      %v1370 = vpop.f32.mrf.mxu0
      %v1371 = vadd.f32 %v1198, %v1370
      %v1372 = vpop.f32.mrf.mxu0
      %1373 = vmatprep.mubr.bf16.mxu0 0
      %1374 = vmatmul.mubr.bf16.gmra.mxu0 %v1239
      %v1375 = vpop.f32.mrf.mxu0
      %v1376 = vadd.f32 %v1198, %v1375
      %v1377 = vpop.f32.mrf.mxu0
      %v1378 = vpop.f32.mrf.mxu0
      %v1379 = vadd.f32 %v1198, %v1378
      %v1380 = vpop.f32.mrf.mxu0
      %1381 = vmatprep.mubr.bf16.mxu0 0
      %1382 = vmatmul.mubr.bf16.gmra.mxu0 %v1242
      %v1383 = vpop.f32.mrf.mxu0
      %v1384 = vadd.f32 %v1198, %v1383
      %v1385 = vpop.f32.mrf.mxu0
      %v1386 = vpop.f32.mrf.mxu0
      %v1387 = vadd.f32 %v1198, %v1386
      %v1388 = vpop.f32.mrf.mxu0
      %1389 = vmatprep.mubr.bf16.mxu0 0
      %1390 = vmatmul.mubr.bf16.gmra.mxu0 %v1245
      %v1391 = vpop.f32.mrf.mxu0
      %v1392 = vadd.f32 %v1198, %v1391
      %v1393 = vpop.f32.mrf.mxu0
      %v1394 = vpop.f32.mrf.mxu0
      %v1395 = vadd.f32 %v1198, %v1394
      %v1396 = vpop.f32.mrf.mxu0
      %1397 = vmatprep.mubr.bf16.mxu0 0
      %1398 = vmatmul.mubr.bf16.gmra.mxu0 %v1248
      %v1399 = vpop.f32.mrf.mxu0
      %v1400 = vadd.f32 %v1198, %v1399
      %v1401 = vpop.f32.mrf.mxu0
      %v1402 = vpop.f32.mrf.mxu0
      %v1403 = vadd.f32 %v1198, %v1402
      %v1404 = vpop.f32.mrf.mxu0
      %1405 = vmatprep.mubr.bf16.mxu0 0
      %1406 = vmatmul.mubr.bf16.gmra.mxu0 %v1251
      %v1407 = vpop.f32.mrf.mxu0
      %v1408 = vadd.f32 %v1198, %v1407
      %v1409 = vpop.f32.mrf.mxu0
      %v1410 = vpop.f32.mrf.mxu0
      %v1411 = vadd.f32 %v1198, %v1410
      %v1412 = vpop.f32.mrf.mxu0
      %1413 = vdwg.mxu0
      %vm1414 = vcmp.gt.f32.partialorder %v1288, 0.0
      %vm1415 = vcmp.gt.f32.partialorder %v1291, 0.0
      %vm1416 = vcmp.gt.f32.partialorder %v1296, 0.0
      %vm1417 = vcmp.gt.f32.partialorder %v1299, 0.0
      %vm1418 = vcmp.gt.f32.partialorder %v1304, 0.0
      %vm1419 = vcmp.gt.f32.partialorder %v1307, 0.0
      %vm1420 = vcmp.gt.f32.partialorder %v1312, 0.0
      %vm1421 = vcmp.gt.f32.partialorder %v1315, 0.0
      %vm1422 = vcmp.gt.f32.partialorder %v1320, 0.0
      %vm1423 = vcmp.gt.f32.partialorder %v1323, 0.0
      %vm1424 = vcmp.gt.f32.partialorder %v1328, 0.0
      %vm1425 = vcmp.gt.f32.partialorder %v1331, 0.0
      %vm1426 = vcmp.gt.f32.partialorder %v1336, 0.0
      %vm1427 = vcmp.gt.f32.partialorder %v1339, 0.0
      %vm1428 = vcmp.gt.f32.partialorder %v1344, 0.0
      %vm1429 = vcmp.gt.f32.partialorder %v1347, 0.0
      %vm1430 = vcmp.gt.f32.partialorder %v1352, 0.0
      %vm1431 = vcmp.gt.f32.partialorder %v1355, 0.0
      %vm1432 = vcmp.gt.f32.partialorder %v1360, 0.0
      %vm1433 = vcmp.gt.f32.partialorder %v1363, 0.0
      %vm1434 = vcmp.gt.f32.partialorder %v1368, 0.0
      %vm1435 = vcmp.gt.f32.partialorder %v1371, 0.0
      %vm1436 = vcmp.gt.f32.partialorder %v1376, 0.0
      %vm1437 = vcmp.gt.f32.partialorder %v1379, 0.0
      %vm1438 = vcmp.gt.f32.partialorder %v1384, 0.0
      %vm1439 = vcmp.gt.f32.partialorder %v1387, 0.0
      %vm1440 = vcmp.gt.f32.partialorder %v1392, 0.0
      %vm1441 = vcmp.gt.f32.partialorder %v1395, 0.0
      %vm1442 = vcmp.gt.f32.partialorder %v1400, 0.0
      %vm1443 = vcmp.gt.f32.partialorder %v1403, 0.0
      %vm1444 = vcmp.gt.f32.partialorder %v1408, 0.0
      %vm1445 = vcmp.gt.f32.partialorder %v1411, 0.0
      %v1446 = vmul.f32 %v1288, 0.01
      %v1447 = vmul.f32 %v1291, 0.01
      %v1448 = vmul.f32 %v1296, 0.01
      %v1449 = vmul.f32 %v1299, 0.01
      %v1450 = vmul.f32 %v1304, 0.01
      %v1451 = vmul.f32 %v1307, 0.01
      %v1452 = vmul.f32 %v1312, 0.01
      %v1453 = vmul.f32 %v1315, 0.01
      %v1454 = vmul.f32 %v1320, 0.01
      %v1455 = vmul.f32 %v1323, 0.01
      %v1456 = vmul.f32 %v1328, 0.01
      %v1457 = vmul.f32 %v1331, 0.01
      %v1458 = vmul.f32 %v1336, 0.01
      %v1459 = vmul.f32 %v1339, 0.01
      %v1460 = vmul.f32 %v1344, 0.01
      %v1461 = vmul.f32 %v1347, 0.01
      %v1462 = vmul.f32 %v1352, 0.01
      %v1463 = vmul.f32 %v1355, 0.01
      %v1464 = vmul.f32 %v1360, 0.01
      %v1465 = vmul.f32 %v1363, 0.01
      %v1466 = vmul.f32 %v1368, 0.01
      %v1467 = vmul.f32 %v1371, 0.01
      %v1468 = vmul.f32 %v1376, 0.01
      %v1469 = vmul.f32 %v1379, 0.01
      %v1470 = vmul.f32 %v1384, 0.01
      %v1471 = vmul.f32 %v1387, 0.01
      %v1472 = vmul.f32 %v1392, 0.01
      %v1473 = vmul.f32 %v1395, 0.01
      %v1474 = vmul.f32 %v1400, 0.01
      %v1475 = vmul.f32 %v1403, 0.01
      %v1476 = vmul.f32 %v1408, 0.01
      %v1477 = vmul.f32 %v1411, 0.01
      %v1478 = vsel %vm1414, %v1288, %v1446
      %v1479 = vsel %vm1415, %v1291, %v1447
      %v1480 = vsel %vm1416, %v1296, %v1448
      %v1481 = vsel %vm1417, %v1299, %v1449
      %v1482 = vsel %vm1418, %v1304, %v1450
      %v1483 = vsel %vm1419, %v1307, %v1451
      %v1484 = vsel %vm1420, %v1312, %v1452
      %v1485 = vsel %vm1421, %v1315, %v1453
      %v1486 = vsel %vm1422, %v1320, %v1454
      %v1487 = vsel %vm1423, %v1323, %v1455
      %v1488 = vsel %vm1424, %v1328, %v1456
      %v1489 = vsel %vm1425, %v1331, %v1457
      %v1490 = vsel %vm1426, %v1336, %v1458
      %v1491 = vsel %vm1427, %v1339, %v1459
      %v1492 = vsel %vm1428, %v1344, %v1460
      %v1493 = vsel %vm1429, %v1347, %v1461
      %v1494 = vsel %vm1430, %v1352, %v1462
      %v1495 = vsel %vm1431, %v1355, %v1463
      %v1496 = vsel %vm1432, %v1360, %v1464
      %v1497 = vsel %vm1433, %v1363, %v1465
      %v1498 = vsel %vm1434, %v1368, %v1466
      %v1499 = vsel %vm1435, %v1371, %v1467
      %v1500 = vsel %vm1436, %v1376, %v1468
      %v1501 = vsel %vm1437, %v1379, %v1469
      %v1502 = vsel %vm1438, %v1384, %v1470
      %v1503 = vsel %vm1439, %v1387, %v1471
      %v1504 = vsel %vm1440, %v1392, %v1472
      %v1505 = vsel %vm1441, %v1395, %v1473
      %v1506 = vsel %vm1442, %v1400, %v1474
      %v1507 = vsel %vm1443, %v1403, %v1475
      %v1508 = vsel %vm1444, %v1408, %v1476
      %v1509 = vsel %vm1445, %v1411, %v1477
      %v1510 = vadd.f32 %v1478, %v1145
      %v1511 = vadd.f32 %v1479, %v1146
      %v1512 = vadd.f32 %v1480, %v1147
      %v1513 = vadd.f32 %v1481, %v1148
      %v1514 = vadd.f32 %v1482, %v1149
      %v1515 = vadd.f32 %v1483, %v1150
      %v1516 = vadd.f32 %v1484, %v1151
      %v1517 = vadd.f32 %v1485, %v1152
      %v1518 = vadd.f32 %v1486, %v1153
      %v1519 = vadd.f32 %v1487, %v1154
      %v1520 = vadd.f32 %v1488, %v1155
      %v1521 = vadd.f32 %v1489, %v1156
      %v1522 = vadd.f32 %v1490, %v1157
      %v1523 = vadd.f32 %v1491, %v1158
      %v1524 = vadd.f32 %v1492, %v1159
      %v1525 = vadd.f32 %v1493, %v1160
      %v1526 = vadd.f32 %v1494, %v1161
      %v1527 = vadd.f32 %v1495, %v1162
      %v1528 = vadd.f32 %v1496, %v1163
      %v1529 = vadd.f32 %v1497, %v1164
      %v1530 = vadd.f32 %v1498, %v1165
      %v1531 = vadd.f32 %v1499, %v1166
      %v1532 = vadd.f32 %v1500, %v1167
      %v1533 = vadd.f32 %v1501, %v1168
      %v1534 = vadd.f32 %v1502, %v1169
      %v1535 = vadd.f32 %v1503, %v1170
      %v1536 = vadd.f32 %v1504, %v1171
      %v1537 = vadd.f32 %v1505, %v1172
      %v1538 = vadd.f32 %v1506, %v1173
      %v1539 = vadd.f32 %v1507, %v1174
      %v1540 = vadd.f32 %v1508, %v1175
      %v1541 = vadd.f32 %v1509, %v1176
      %v1542 = vstv %s279
      %v1543 = vmul.f32 %v1542, %v1510
      %v1544 = vmul.f32 %v1542, %v1511
      %v1545 = vmul.f32 %v1542, %v1512
      %v1546 = vmul.f32 %v1542, %v1513
      %v1547 = vmul.f32 %v1542, %v1514
      %v1548 = vmul.f32 %v1542, %v1515
      %v1549 = vmul.f32 %v1542, %v1516
      %v1550 = vmul.f32 %v1542, %v1517
      %v1551 = vmul.f32 %v1542, %v1518
      %v1552 = vmul.f32 %v1542, %v1519
      %v1553 = vmul.f32 %v1542, %v1520
      %v1554 = vmul.f32 %v1542, %v1521
      %v1555 = vmul.f32 %v1542, %v1522
      %v1556 = vmul.f32 %v1542, %v1523
      %v1557 = vmul.f32 %v1542, %v1524
      %v1558 = vmul.f32 %v1542, %v1525
      %v1559 = vmul.f32 %v1542, %v1526
      %v1560 = vmul.f32 %v1542, %v1527
      %v1561 = vmul.f32 %v1542, %v1528
      %v1562 = vmul.f32 %v1542, %v1529
      %v1563 = vmul.f32 %v1542, %v1530
      %v1564 = vmul.f32 %v1542, %v1531
      %v1565 = vmul.f32 %v1542, %v1532
      %v1566 = vmul.f32 %v1542, %v1533
      %v1567 = vmul.f32 %v1542, %v1534
      %v1568 = vmul.f32 %v1542, %v1535
      %v1569 = vmul.f32 %v1542, %v1536
      %v1570 = vmul.f32 %v1542, %v1537
      %v1571 = vmul.f32 %v1542, %v1538
      %v1572 = vmul.f32 %v1542, %v1539
      %v1573 = vmul.f32 %v1542, %v1540
      %v1574 = vmul.f32 %v1542, %v1541
      %v1575 = vadd.f32 %v312, %v1543
      %v1576 = vadd.f32 %v313, %v1544
      %v1577 = vadd.f32 %v314, %v1545
      %v1578 = vadd.f32 %v315, %v1546
      %v1579 = vadd.f32 %v316, %v1547
      %v1580 = vadd.f32 %v317, %v1548
      %v1581 = vadd.f32 %v318, %v1549
      %v1582 = vadd.f32 %v319, %v1550
      %v1583 = vadd.f32 %v320, %v1551
      %v1584 = vadd.f32 %v321, %v1552
      %v1585 = vadd.f32 %v322, %v1553
      %v1586 = vadd.f32 %v323, %v1554
      %v1587 = vadd.f32 %v324, %v1555
      %v1588 = vadd.f32 %v325, %v1556
      %v1589 = vadd.f32 %v326, %v1557
      %v1590 = vadd.f32 %v327, %v1558
      %v1591 = vadd.f32 %v328, %v1559
      %v1592 = vadd.f32 %v329, %v1560
      %v1593 = vadd.f32 %v330, %v1561
      %v1594 = vadd.f32 %v331, %v1562
      %v1595 = vadd.f32 %v332, %v1563
      %v1596 = vadd.f32 %v333, %v1564
      %v1597 = vadd.f32 %v334, %v1565
      %v1598 = vadd.f32 %v335, %v1566
      %v1599 = vadd.f32 %v336, %v1567
      %v1600 = vadd.f32 %v337, %v1568
      %v1601 = vadd.f32 %v338, %v1569
      %v1602 = vadd.f32 %v339, %v1570
      %v1603 = vadd.f32 %v340, %v1571
      %v1604 = vadd.f32 %v341, %v1572
      %v1605 = vadd.f32 %v342, %v1573
      %v1606 = vadd.f32 %v343, %v1574
      %1607 = vst.msk [vmem:[%s276] sm:$0xff] %vm655, %v1575
      %1608 = vst.msk [vmem:[%s276 + $0x8] sm:$0xff] %vm655, %v1576
      %1609 = vst.msk [vmem:[%s276 + $0x10] sm:$0xff] %vm655, %v1577
      %1610 = vst.msk [vmem:[%s276 + $0x18] sm:$0xff] %vm655, %v1578
      %1611 = vst.msk [vmem:[%s276 + $0x20] sm:$0xff] %vm655, %v1579
      %1612 = vst.msk [vmem:[%s276 + $0x28] sm:$0xff] %vm655, %v1580
      %1613 = vst.msk [vmem:[%s276 + $0x30] sm:$0xff] %vm655, %v1581
      %1614 = vst.msk [vmem:[%s276 + $0x38] sm:$0xff] %vm655, %v1582
      %1615 = vst.msk [vmem:[%s276 + $0x40] sm:$0xff] %vm655, %v1583
      %1616 = vst.msk [vmem:[%s276 + $0x48] sm:$0xff] %vm655, %v1584
      %1617 = vst.msk [vmem:[%s276 + $0x50] sm:$0xff] %vm655, %v1585
      %1618 = vst.msk [vmem:[%s276 + $0x58] sm:$0xff] %vm655, %v1586
      %1619 = vst.msk [vmem:[%s276 + $0x60] sm:$0xff] %vm655, %v1587
      %1620 = vst.msk [vmem:[%s276 + $0x68] sm:$0xff] %vm655, %v1588
      %1621 = vst.msk [vmem:[%s276 + $0x70] sm:$0xff] %vm655, %v1589
      %1622 = vst.msk [vmem:[%s276 + $0x78] sm:$0xff] %vm655, %v1590
      %1623 = vst.msk [vmem:[%s276 + $0x80] sm:$0xff] %vm655, %v1591
      %1624 = vst.msk [vmem:[%s276 + $0x88] sm:$0xff] %vm655, %v1592
      %1625 = vst.msk [vmem:[%s276 + $0x90] sm:$0xff] %vm655, %v1593
      %1626 = vst.msk [vmem:[%s276 + $0x98] sm:$0xff] %vm655, %v1594
      %1627 = vst.msk [vmem:[%s276 + $0xa0] sm:$0xff] %vm655, %v1595
      %1628 = vst.msk [vmem:[%s276 + $0xa8] sm:$0xff] %vm655, %v1596
      %1629 = vst.msk [vmem:[%s276 + $0xb0] sm:$0xff] %vm655, %v1597
      %1630 = vst.msk [vmem:[%s276 + $0xb8] sm:$0xff] %vm655, %v1598
      %1631 = vst.msk [vmem:[%s276 + $0xc0] sm:$0xff] %vm655, %v1599
      %1632 = vst.msk [vmem:[%s276 + $0xc8] sm:$0xff] %vm655, %v1600
      %1633 = vst.msk [vmem:[%s276 + $0xd0] sm:$0xff] %vm655, %v1601
      %1634 = vst.msk [vmem:[%s276 + $0xd8] sm:$0xff] %vm655, %v1602
      %1635 = vst.msk [vmem:[%s276 + $0xe0] sm:$0xff] %vm655, %v1603
      %1636 = vst.msk [vmem:[%s276 + $0xe8] sm:$0xff] %vm655, %v1604
      %1637 = vst.msk [vmem:[%s276 + $0xf0] sm:$0xff] %vm655, %v1605
      %1638 = vst.msk [vmem:[%s276 + $0xf8] sm:$0xff] %vm655, %v1606
      %s1639 = smul.u32 32, %s18
      %p1640 = scmp.lt.s32.totalorder %s1639, 63
      %s1641 = scalar_select %p1640, %s1639, 63
      %s1642 = smul.addr %s1641, 8
      %s1643 = scalar_lea.vmem %s6, %s1642
      // Predicated region
      $region45: #{tpu_custom_call.1} parent=43 // pred_check
        %p1644 = pneg %p172
      $region46: #{tpu_custom_call.1} parent=43 // pred_check_branch
        %1646 = sbr.rel (%p1644) target = $region48
      $region47: #{tpu_custom_call.1} parent=43 // pred_region
        %s1647 = smul.u32 32, %s18
      $region48: #{tpu_custom_call.1} parent=43 // pred_fallthru
        _
    $region44: #{tpu_custom_call.1} parent=5 // pred_fallthru
      _
    %p1648 = scmp.le.s32.totalorder 2, %s13
    // Predicated region
    $region49: #{tpu_custom_call.1} parent=5 // pred_check
      %p1649 = pneg %p1648
    $region50: #{tpu_custom_call.1} parent=5 // pred_check_branch
      %1651 = sbr.rel (%p1649) target = $region52
    $region51: #{tpu_custom_call.1} parent=5 // pred_region
      %s1652 = ssub.s32 %s13, 2
      // Predicated region
      $region53: #{tpu_custom_call.1} parent=51 // pred_check
        %p1653 = pneg %p178
      $region54: #{tpu_custom_call.1} parent=51 // pred_check_branch
        %1655 = sbr.rel (%p1653) target = $region56
      $region55: #{tpu_custom_call.1} parent=51 // pred_region
        %s1656 = smul.u32 32, %s19
        %p1657 = scmp.lt.s32.totalorder %s1656, 63
        %s1658 = scalar_select %p1657, %s1656, 63
        %s1659 = smul.addr %s1658, 8
        %s1660 = scalar_lea.vmem %s6, %s1659
      $region56: #{tpu_custom_call.1} parent=51 // pred_fallthru
        _
    $region52: #{tpu_custom_call.1} parent=5 // pred_fallthru
      _
  $region6: #{tpu_custom_call.1} parent=0 // loop_footer
    %s17 = sadd.s32 1, %s13
  $region7: #{tpu_custom_call.1} parent=0 // loop_footer_branch
    %12 = sbr.rel target = $region3
  $region8: #{tpu_custom_call.1} parent=0 // loop_exit
    _

</llo_original>
